<compile_context>
chip_gen: v7x
topology: tpu7x:2x2x1
jax: 0.10.0
libtpu: 0.0.40
codegen_flags: <defaults>
</compile_context>

<pallas_src>
import functools

import jax
import jax.numpy as jnp
from jax.experimental import pallas as pl
from jax.experimental.pallas import tpu as pltpu


# ----------------------------------------------------------------------------
# Fused kernel: one (batch, row-tile) grid step.
# ----------------------------------------------------------------------------
def _ghost_kernel(xm_ref, xt_ref, xb_ref, w1_ref, s1_ref, b1_ref,
                  wd_ref, s2_ref, b2_ref, o_ref, *, th, W, H, Cin, Ch, use_mxu):
    # xm_ref : (1, th, W, Cin)   main row slab of the input
    # xt_ref : (1, 1,  W, Cin)   row above the slab (index clamped at border)
    # xb_ref : (1, 1,  W, Cin)   row below the slab (index clamped at border)
    # w1_ref : (Cin, Ch)         1x1 conv weight
    # s1/b1  : (1, Ch)           folded BN1 scale / bias
    # wd_ref : (3, 3, Ch)        depthwise 3x3 weight
    # s2/b2  : (1, Ch)           folded BN2 scale / bias
    # o_ref  : (1, th, W, 2*Ch)  lane-dense output tile: [...,:Ch]=x1, [...,Ch:]=x2
    r = pl.program_id(1)
    row0 = r * th

    w1 = w1_ref[...].astype(jnp.float32)
    s1 = s1_ref[0, :]
    b1 = b1_ref[0, :]
    wd = wd_ref[...].astype(jnp.float32)
    s2 = s2_ref[0, :]
    b2 = b2_ref[0, :]

    # Extended input slab: halo row above + th rows + halo row below.
    x_ext = jnp.concatenate([xt_ref[0], xm_ref[0], xb_ref[0]],
                            axis=0).astype(jnp.float32)            # (th+2, W, Cin)

    # ---- 1x1 conv + BN1 + ReLU over all (th+2)*W pixels in ONE pass. ----
    if use_mxu:
        y = jnp.dot(x_ext.reshape((th + 2) * W, Cin), w1,
                    preferred_element_type=jnp.float32).reshape(th + 2, W, Ch)
    else:
        # Tiny Cin: pointwise conv as Cin broadcast-FMAs on the VPU.
        y = jnp.zeros((th + 2, W, Ch), jnp.float32)
        for c in range(Cin):                                        # static unroll
            y = y + x_ext[:, :, c:c + 1] * w1[c, :]
    x1_ext = jnp.maximum(y * s1 + b1, 0.0)                          # (th+2, W, Ch)

    # Zero rows that fall outside the image: top/bottom conv zero padding and
    # any padded rows of a partial last tile (replaces scratch zero-fill).
    g = row0 - 1 + jax.lax.broadcasted_iota(jnp.int32, (th + 2, 1, 1), 0)
    x1_ext = jnp.where(jnp.logical_and(g >= 0, g < H), x1_ext, 0.0)

    # Column-shifted copies of x1, built once (zero column = conv padding on W),
    # so the 9 stencil taps below are aligned outer-dim row slices only.
    zcol = jnp.zeros((th + 2, 1, Ch), jnp.float32)
    x1_l = jnp.concatenate([zcol, x1_ext[:, :W - 1, :]], axis=1)    # [..,c]=x1[..,c-1]
    x1_r = jnp.concatenate([x1_ext[:, 1:, :], zcol], axis=1)        # [..,c]=x1[..,c+1]
    shifted = (x1_l, x1_ext, x1_r)

    # ---- depthwise 3x3 conv + BN2 + ReLU: static 9-tap unroll, f32 accum. ----
    acc = jnp.zeros((th, W, Ch), jnp.float32)
    for dy in range(3):
        for dx in range(3):
            acc = acc + shifted[dx][dy:dy + th, :, :] * wd[dy, dx, :]
    x2_tile = jnp.maximum(acc * s2 + b2, 0.0)

    # Fused concat: one lane-dense full-block store of [x1 | x2].
    x1_tile = x1_ext[1:th + 1, :, :]
    out = jnp.concatenate([x1_tile, x2_tile], axis=-1)              # (th, W, 2*Ch)
    o_ref[0, :, :, :] = out.astype(o_ref.dtype)


# ----------------------------------------------------------------------------
# Wrappers
# ----------------------------------------------------------------------------
def ghost_module_forward_nhwc(x_nhwc, params, *, row_tile=32):
    """Fused GhostModule forward in NHWC. x: (B, H, W, Cin) -> (B, H, W, 2*Ch)."""
    B, H, W, Cin = x_nhwc.shape
    w1 = params["w1"]                       # (Cin, Ch)
    s1, b1 = params["bn1_scale"], params["bn1_bias"]
    wd = params["wd"]                       # (3, 3, Ch)
    s2, b2 = params["bn2_scale"], params["bn2_bias"]
    Ch = w1.shape[1]

    # cdiv row tiling: never collapses to th=1; whole-H tiles for small maps.
    th = max(1, min(row_tile, H))
    n_r = pl.cdiv(H, th)
    use_mxu = Cin >= 16   # tiny Cin -> VPU broadcast-FMA path instead of MXU

    kernel = functools.partial(_ghost_kernel, th=th, W=W, H=H, Cin=Cin, Ch=Ch,
                               use_mxu=use_mxu)
    out = pl.pallas_call(
        kernel,
        out_shape=jax.ShapeDtypeStruct((B, H, W, 2 * Ch), x_nhwc.dtype),
        grid=(B, n_r),
        in_specs=[
            # main th-row slab
            pl.BlockSpec((1, th, W, Cin), lambda b, r: (b, r, 0, 0)),
            # halo row above (clamped; zeroed in-kernel at the border)
            pl.BlockSpec((1, 1, W, Cin),
                         lambda b, r: (b, jnp.maximum(r * th - 1, 0), 0, 0)),
            # halo row below (clamped; zeroed in-kernel at the border)
            pl.BlockSpec((1, 1, W, Cin),
                         lambda b, r: (b, jnp.minimum(r * th + th, H - 1), 0, 0)),
            pl.BlockSpec((Cin, Ch), lambda b, r: (0, 0)),
            pl.BlockSpec((1, Ch), lambda b, r: (0, 0)),
            pl.BlockSpec((1, Ch), lambda b, r: (0, 0)),
            pl.BlockSpec((3, 3, Ch), lambda b, r: (0, 0, 0)),
            pl.BlockSpec((1, Ch), lambda b, r: (0, 0)),
            pl.BlockSpec((1, Ch), lambda b, r: (0, 0)),
        ],
        out_specs=pl.BlockSpec((1, th, W, 2 * Ch), lambda b, r: (b, r, 0, 0)),
        compiler_params=pltpu.CompilerParams(
            dimension_semantics=("parallel", "parallel"),
            # Explicit scoped-VMEM budget; 32 MiB fits every generation's
            # physical VMEM (v7x = 64 MiB, v5e/v6e = 128 MiB).
            vmem_limit_bytes=32 * 1024 * 1024),
    )(x_nhwc, x_nhwc, x_nhwc,
      w1, s1.reshape(1, Ch), b1.reshape(1, Ch),
      wd, s2.reshape(1, Ch), b2.reshape(1, Ch))
    return out


def ghost_module_forward(x_nchw, params, *, row_tile=32):
    """GhostModule forward matching the PyTorch NCHW contract.

    Prefer `ghost_module_forward_nhwc` if the surrounding model is NHWC: it
    avoids both boundary transposes (each an extra HBM pass over the tensor).
    """
    x_nhwc = jnp.transpose(x_nchw, (0, 2, 3, 1))
    out_nhwc = ghost_module_forward_nhwc(x_nhwc, params, row_tile=row_tile)
    # Channel order after the lane concat is [x1 | x2] == torch.cat(dim=1).
    return jnp.transpose(out_nhwc, (0, 3, 1, 2))


# ----------------------------------------------------------------------------
# Deterministic parameters (GhostModule(inp, oup, ratio=2, dw_size=3), BN folded)
# ----------------------------------------------------------------------------
def make_params(key, inp, oup, ratio=2):
    hidden = oup // ratio
    new_channels = hidden * (ratio - 1)
    assert new_channels == hidden, "kernel assumes ratio=2 (1 output per DW group)"
    eps = 1e-5
    ks = jax.random.split(key, 10)

    # primary conv weight: torch (hidden, inp, 1, 1) -> stored as (inp, hidden)
    w1 = jax.random.normal(ks[0], (inp, hidden), jnp.float32) * 0.2
    g1 = jax.random.uniform(ks[1], (hidden,), jnp.float32, 0.5, 1.5)
    be1 = jax.random.normal(ks[2], (hidden,), jnp.float32) * 0.1
    mu1 = jax.random.normal(ks[3], (hidden,), jnp.float32) * 0.1
    v1 = jax.random.uniform(ks[4], (hidden,), jnp.float32, 0.5, 1.5)

    # depthwise conv weight: torch (hidden, 1, 3, 3) -> stored as (3, 3, hidden)
    wd = jax.random.normal(ks[5], (3, 3, hidden), jnp.float32) * 0.2
    g2 = jax.random.uniform(ks[6], (hidden,), jnp.float32, 0.5, 1.5)
    be2 = jax.random.normal(ks[7], (hidden,), jnp.float32) * 0.1
    mu2 = jax.random.normal(ks[8], (hidden,), jnp.float32) * 0.1
    v2 = jax.random.uniform(ks[9], (hidden,), jnp.float32, 0.5, 1.5)

    s1 = g1 / jnp.sqrt(v1 + eps)
    s2 = g2 / jnp.sqrt(v2 + eps)
    return {
        "w1": w1, "bn1_scale": s1, "bn1_bias": be1 - mu1 * s1,
        "wd": wd, "bn2_scale": s2, "bn2_bias": be2 - mu2 * s2,
    }


# ----------------------------------------------------------------------------
# Pure-JAX reference (lax.conv) for correctness checking.
# ----------------------------------------------------------------------------
def ref_forward(x_nchw, params):
    Cin = x_nchw.shape[1]
    Ch = params["w1"].shape[1]
    w1_oihw = jnp.transpose(params["w1"], (1, 0)).reshape(Ch, Cin, 1, 1)
    y1 = jax.lax.conv_general_dilated(
        x_nchw, w1_oihw, (1, 1), [(0, 0), (0, 0)],
        dimension_numbers=("NCHW", "OIHW", "NCHW"))
    y1 = y1 * params["bn1_scale"][None, :, None, None] + params["bn1_bias"][None, :, None, None]
    x1 = jnp.maximum(y1, 0.0)

    wd_oihw = jnp.transpose(params["wd"], (2, 0, 1))[:, None, :, :]  # (Ch,1,3,3)
    y2 = jax.lax.conv_general_dilated(
        x1, wd_oihw, (1, 1), [(1, 1), (1, 1)],
        dimension_numbers=("NCHW", "OIHW", "NCHW"),
        feature_group_count=Ch)
    y2 = y2 * params["bn2_scale"][None, :, None, None] + params["bn2_bias"][None, :, None, None]
    x2 = jnp.maximum(y2, 0.0)
    return jnp.concatenate([x1, x2], axis=1)


if __name__ == "__main__":
    B, inp, H, W = 2, 4, 16, 16
    oup = 8  # ratio=2 -> hidden=4, new_channels=4

    key = jax.random.PRNGKey(0)
    kx, kp = jax.random.split(key)
    x = jax.random.normal(kx, (B, inp, H, W), jnp.float32)
    params = make_params(kp, inp, oup)

    ref = jax.block_until_ready(ref_forward(x, params))

    # row_tile=32 -> whole-H tile (border zero-padding path);
    # row_tile=8  -> two row tiles per image (interior halo path).
    for rt in (32, 8):
        out = jax.block_until_ready(ghost_module_forward(x, params, row_tile=rt))
        assert out.shape == (B, oup, H, W), out.shape
        err = jnp.max(jnp.abs(out - ref))
        assert jnp.allclose(out, ref, atol=1e-4, rtol=1e-4), \
            f"row_tile={rt}: max abs err {err}"

    print("KERNEL_OK")
</pallas_src>

<mosaic_0001>
module attributes {stable_mosaic.version = 11 : i64} {
  func.func @_ghost_kernel(%arg0: i32, %arg1: i32, %arg2: memref<1x16x16x4xf32, #tpu.memory_space<vmem>>, %arg3: memref<1x1x16x4xf32, #tpu.memory_space<vmem>>, %arg4: memref<1x1x16x4xf32, #tpu.memory_space<vmem>>, %arg5: memref<4x4xf32, #tpu.memory_space<vmem>>, %arg6: memref<1x4xf32, #tpu.memory_space<vmem>>, %arg7: memref<1x4xf32, #tpu.memory_space<vmem>>, %arg8: memref<3x3x4xf32, #tpu.memory_space<vmem>>, %arg9: memref<1x4xf32, #tpu.memory_space<vmem>>, %arg10: memref<1x4xf32, #tpu.memory_space<vmem>>, %arg11: memref<1x16x16x8xf32, #tpu.memory_space<vmem>>) attributes {dimension_semantics = [#tpu.dimension_semantics<parallel>, #tpu.dimension_semantics<parallel>], iteration_bounds = array<i64: 2, 1>, scalar_prefetch = 0 : i64, scratch_operands = 0 : i64, tpu.core_type = #tpu.core_type<tc>, window_params = [{transform_indices = @transform_0, window_bounds = array<i64: 1, 16, 16, 4>}, {transform_indices = @transform_1, window_bounds = array<i64: 1, 1, 16, 4>}, {transform_indices = @transform_2, window_bounds = array<i64: 1, 1, 16, 4>}, {pipeline_mode = #tpu.pipeline_mode<synchronous>, transform_indices = @transform_3, window_bounds = array<i64: 4, 4>}, {pipeline_mode = #tpu.pipeline_mode<synchronous>, transform_indices = @transform_4, window_bounds = array<i64: 1, 4>}, {pipeline_mode = #tpu.pipeline_mode<synchronous>, transform_indices = @transform_5, window_bounds = array<i64: 1, 4>}, {pipeline_mode = #tpu.pipeline_mode<synchronous>, transform_indices = @transform_6, window_bounds = array<i64: 3, 3, 4>}, {pipeline_mode = #tpu.pipeline_mode<synchronous>, transform_indices = @transform_7, window_bounds = array<i64: 1, 4>}, {pipeline_mode = #tpu.pipeline_mode<synchronous>, transform_indices = @transform_8, window_bounds = array<i64: 1, 4>}, {transform_indices = @transform_9, window_bounds = array<i64: 1, 16, 16, 8>}]} {
    %c16_i32 = arith.constant 16 : i32
    %0 = arith.muli %arg1, %c16_i32 : i32
    %c0 = arith.constant 0 : index
    %c0_0 = arith.constant 0 : index
    %1 = vector.load %arg5[%c0, %c0_0] : memref<4x4xf32, #tpu.memory_space<vmem>>, vector<4x4xf32>
    %c0_1 = arith.constant 0 : index
    %c0_2 = arith.constant 0 : index
    %2 = vector.load %arg6[%c0_1, %c0_2] : memref<1x4xf32, #tpu.memory_space<vmem>>, vector<1x4xf32>
    %3 = vector.shape_cast %2 : vector<1x4xf32> to vector<4xf32>
    %c0_3 = arith.constant 0 : index
    %c0_4 = arith.constant 0 : index
    %4 = vector.load %arg7[%c0_3, %c0_4] : memref<1x4xf32, #tpu.memory_space<vmem>>, vector<1x4xf32>
    %5 = vector.shape_cast %4 : vector<1x4xf32> to vector<4xf32>
    %c0_5 = arith.constant 0 : index
    %c0_6 = arith.constant 0 : index
    %c0_7 = arith.constant 0 : index
    %6 = vector.load %arg8[%c0_5, %c0_6, %c0_7] : memref<3x3x4xf32, #tpu.memory_space<vmem>>, vector<3x3x4xf32>
    %c0_8 = arith.constant 0 : index
    %c0_9 = arith.constant 0 : index
    %7 = vector.load %arg9[%c0_8, %c0_9] : memref<1x4xf32, #tpu.memory_space<vmem>>, vector<1x4xf32>
    %8 = vector.shape_cast %7 : vector<1x4xf32> to vector<4xf32>
    %c0_10 = arith.constant 0 : index
    %c0_11 = arith.constant 0 : index
    %9 = vector.load %arg10[%c0_10, %c0_11] : memref<1x4xf32, #tpu.memory_space<vmem>>, vector<1x4xf32>
    %10 = vector.shape_cast %9 : vector<1x4xf32> to vector<4xf32>
    %c0_12 = arith.constant 0 : index
    %c0_13 = arith.constant 0 : index
    %c0_14 = arith.constant 0 : index
    %c0_15 = arith.constant 0 : index
    %11 = vector.load %arg3[%c0_12, %c0_13, %c0_14, %c0_15] : memref<1x1x16x4xf32, #tpu.memory_space<vmem>>, vector<1x1x16x4xf32>
    %12 = vector.shape_cast %11 : vector<1x1x16x4xf32> to vector<1x16x4xf32>
    %c0_16 = arith.constant 0 : index
    %c0_17 = arith.constant 0 : index
    %c0_18 = arith.constant 0 : index
    %c0_19 = arith.constant 0 : index
    %13 = vector.load %arg2[%c0_16, %c0_17, %c0_18, %c0_19] : memref<1x16x16x4xf32, #tpu.memory_space<vmem>>, vector<1x16x16x4xf32>
    %14 = vector.shape_cast %13 : vector<1x16x16x4xf32> to vector<16x16x4xf32>
    %c0_20 = arith.constant 0 : index
    %c0_21 = arith.constant 0 : index
    %c0_22 = arith.constant 0 : index
    %c0_23 = arith.constant 0 : index
    %15 = vector.load %arg4[%c0_20, %c0_21, %c0_22, %c0_23] : memref<1x1x16x4xf32, #tpu.memory_space<vmem>>, vector<1x1x16x4xf32>
    %16 = vector.shape_cast %15 : vector<1x1x16x4xf32> to vector<1x16x4xf32>
    %17 = tpu.concatenate %12, %14, %16 in 0 : vector<1x16x4xf32>, vector<16x16x4xf32>, vector<1x16x4xf32> -> vector<18x16x4xf32>
    %cst = arith.constant 0.000000e+00 : f32
    %18 = vector.broadcast %cst : f32 to vector<18x16x4xf32>
    %19 = vector.extract_strided_slice %17 {offsets = [0, 0, 0], sizes = [18, 16, 1], strides = [1, 1, 1]} : vector<18x16x4xf32> to vector<18x16x1xf32>
    %20 = vector.extract_strided_slice %1 {offsets = [0, 0], sizes = [1, 4], strides = [1, 1]} : vector<4x4xf32> to vector<1x4xf32>
    %21 = vector.shape_cast %20 : vector<1x4xf32> to vector<4xf32>
    %22 = vector.shape_cast %21 : vector<4xf32> to vector<1x1x4xf32>
    %23 = vector.broadcast %19 : vector<18x16x1xf32> to vector<18x16x4xf32>
    %24 = vector.broadcast %22 : vector<1x1x4xf32> to vector<18x16x4xf32>
    %25 = arith.mulf %23, %24 : vector<18x16x4xf32>
    %26 = arith.addf %18, %25 : vector<18x16x4xf32>
    %27 = vector.extract_strided_slice %17 {offsets = [0, 0, 1], sizes = [18, 16, 1], strides = [1, 1, 1]} : vector<18x16x4xf32> to vector<18x16x1xf32>
    %28 = vector.extract_strided_slice %1 {offsets = [1, 0], sizes = [1, 4], strides = [1, 1]} : vector<4x4xf32> to vector<1x4xf32>
    %29 = vector.shape_cast %28 : vector<1x4xf32> to vector<4xf32>
    %30 = vector.shape_cast %29 : vector<4xf32> to vector<1x1x4xf32>
    %31 = vector.broadcast %27 : vector<18x16x1xf32> to vector<18x16x4xf32>
    %32 = vector.broadcast %30 : vector<1x1x4xf32> to vector<18x16x4xf32>
    %33 = arith.mulf %31, %32 : vector<18x16x4xf32>
    %34 = arith.addf %26, %33 : vector<18x16x4xf32>
    %35 = vector.extract_strided_slice %17 {offsets = [0, 0, 2], sizes = [18, 16, 1], strides = [1, 1, 1]} : vector<18x16x4xf32> to vector<18x16x1xf32>
    %36 = vector.extract_strided_slice %1 {offsets = [2, 0], sizes = [1, 4], strides = [1, 1]} : vector<4x4xf32> to vector<1x4xf32>
    %37 = vector.shape_cast %36 : vector<1x4xf32> to vector<4xf32>
    %38 = vector.shape_cast %37 : vector<4xf32> to vector<1x1x4xf32>
    %39 = vector.broadcast %35 : vector<18x16x1xf32> to vector<18x16x4xf32>
    %40 = vector.broadcast %38 : vector<1x1x4xf32> to vector<18x16x4xf32>
    %41 = arith.mulf %39, %40 : vector<18x16x4xf32>
    %42 = arith.addf %34, %41 : vector<18x16x4xf32>
    %43 = vector.extract_strided_slice %17 {offsets = [0, 0, 3], sizes = [18, 16, 1], strides = [1, 1, 1]} : vector<18x16x4xf32> to vector<18x16x1xf32>
    %44 = vector.extract_strided_slice %1 {offsets = [3, 0], sizes = [1, 4], strides = [1, 1]} : vector<4x4xf32> to vector<1x4xf32>
    %45 = vector.shape_cast %44 : vector<1x4xf32> to vector<4xf32>
    %46 = vector.shape_cast %45 : vector<4xf32> to vector<1x1x4xf32>
    %47 = vector.broadcast %43 : vector<18x16x1xf32> to vector<18x16x4xf32>
    %48 = vector.broadcast %46 : vector<1x1x4xf32> to vector<18x16x4xf32>
    %49 = arith.mulf %47, %48 : vector<18x16x4xf32>
    %50 = arith.addf %42, %49 : vector<18x16x4xf32>
    %51 = vector.shape_cast %3 : vector<4xf32> to vector<1x1x4xf32>
    %52 = vector.broadcast %51 : vector<1x1x4xf32> to vector<18x16x4xf32>
    %53 = arith.mulf %50, %52 : vector<18x16x4xf32>
    %54 = vector.shape_cast %5 : vector<4xf32> to vector<1x1x4xf32>
    %55 = vector.broadcast %54 : vector<1x1x4xf32> to vector<18x16x4xf32>
    %56 = arith.addf %53, %55 : vector<18x16x4xf32>
    %cst_24 = arith.constant 0.000000e+00 : f32
    %57 = vector.broadcast %cst_24 : f32 to vector<18x16x4xf32>
    %58 = arith.maximumf %56, %57 : vector<18x16x4xf32>
    %c1_i32 = arith.constant 1 : i32
    %59 = arith.subi %0, %c1_i32 : i32
    %60 = tpu.iota {dimensions = array<i32: 0>} : vector<18x1x1xi32>
    %61 = vector.broadcast %59 : i32 to vector<18x1x1xi32>
    %62 = arith.addi %61, %60 : vector<18x1x1xi32>
    %c0_i32 = arith.constant 0 : i32
    %63 = vector.broadcast %c0_i32 : i32 to vector<18x1x1xi32>
    %64 = arith.cmpi sge, %62, %63 : vector<18x1x1xi32>
    %c16_i32_25 = arith.constant 16 : i32
    %65 = vector.broadcast %c16_i32_25 : i32 to vector<18x1x1xi32>
    %66 = arith.cmpi slt, %62, %65 : vector<18x1x1xi32>
    %67 = arith.andi %64, %66 : vector<18x1x1xi1>
    %cst_26 = arith.constant 0.000000e+00 : f32
    %68 = vector.shape_cast %67 : vector<18x1x1xi1> to vector<18x1x1xi1>
    %69 = vector.broadcast %68 : vector<18x1x1xi1> to vector<18x16x4xi1>
    %70 = vector.broadcast %cst_26 : f32 to vector<18x16x4xf32>
    %71 = arith.select %69, %58, %70 : vector<18x16x4xi1>, vector<18x16x4xf32>
    %cst_27 = arith.constant 0.000000e+00 : f32
    %72 = vector.broadcast %cst_27 : f32 to vector<18x1x4xf32>
    %73 = vector.extract_strided_slice %71 {offsets = [0, 0, 0], sizes = [18, 15, 4], strides = [1, 1, 1]} : vector<18x16x4xf32> to vector<18x15x4xf32>
    %74 = tpu.concatenate %72, %73 in 1 : vector<18x1x4xf32>, vector<18x15x4xf32> -> vector<18x16x4xf32>
    %75 = vector.extract_strided_slice %71 {offsets = [0, 1, 0], sizes = [18, 15, 4], strides = [1, 1, 1]} : vector<18x16x4xf32> to vector<18x15x4xf32>
    %76 = tpu.concatenate %75, %72 in 1 : vector<18x15x4xf32>, vector<18x1x4xf32> -> vector<18x16x4xf32>
    %cst_28 = arith.constant 0.000000e+00 : f32
    %77 = vector.broadcast %cst_28 : f32 to vector<16x16x4xf32>
    %78 = vector.extract_strided_slice %74 {offsets = [0, 0, 0], sizes = [16, 16, 4], strides = [1, 1, 1]} : vector<18x16x4xf32> to vector<16x16x4xf32>
    %79 = vector.extract_strided_slice %6 {offsets = [0, 0, 0], sizes = [1, 1, 4], strides = [1, 1, 1]} : vector<3x3x4xf32> to vector<1x1x4xf32>
    %80 = vector.shape_cast %79 : vector<1x1x4xf32> to vector<4xf32>
    %81 = vector.shape_cast %80 : vector<4xf32> to vector<1x1x4xf32>
    %82 = vector.broadcast %81 : vector<1x1x4xf32> to vector<16x16x4xf32>
    %83 = arith.mulf %78, %82 : vector<16x16x4xf32>
    %84 = arith.addf %77, %83 : vector<16x16x4xf32>
    %85 = vector.extract_strided_slice %71 {offsets = [0, 0, 0], sizes = [16, 16, 4], strides = [1, 1, 1]} : vector<18x16x4xf32> to vector<16x16x4xf32>
    %86 = vector.extract_strided_slice %6 {offsets = [0, 1, 0], sizes = [1, 1, 4], strides = [1, 1, 1]} : vector<3x3x4xf32> to vector<1x1x4xf32>
    %87 = vector.shape_cast %86 : vector<1x1x4xf32> to vector<4xf32>
    %88 = vector.shape_cast %87 : vector<4xf32> to vector<1x1x4xf32>
    %89 = vector.broadcast %88 : vector<1x1x4xf32> to vector<16x16x4xf32>
    %90 = arith.mulf %85, %89 : vector<16x16x4xf32>
    %91 = arith.addf %84, %90 : vector<16x16x4xf32>
    %92 = vector.extract_strided_slice %76 {offsets = [0, 0, 0], sizes = [16, 16, 4], strides = [1, 1, 1]} : vector<18x16x4xf32> to vector<16x16x4xf32>
    %93 = vector.extract_strided_slice %6 {offsets = [0, 2, 0], sizes = [1, 1, 4], strides = [1, 1, 1]} : vector<3x3x4xf32> to vector<1x1x4xf32>
    %94 = vector.shape_cast %93 : vector<1x1x4xf32> to vector<4xf32>
    %95 = vector.shape_cast %94 : vector<4xf32> to vector<1x1x4xf32>
    %96 = vector.broadcast %95 : vector<1x1x4xf32> to vector<16x16x4xf32>
    %97 = arith.mulf %92, %96 : vector<16x16x4xf32>
    %98 = arith.addf %91, %97 : vector<16x16x4xf32>
    %99 = vector.extract_strided_slice %74 {offsets = [1, 0, 0], sizes = [16, 16, 4], strides = [1, 1, 1]} : vector<18x16x4xf32> to vector<16x16x4xf32>
    %100 = vector.extract_strided_slice %6 {offsets = [1, 0, 0], sizes = [1, 1, 4], strides = [1, 1, 1]} : vector<3x3x4xf32> to vector<1x1x4xf32>
    %101 = vector.shape_cast %100 : vector<1x1x4xf32> to vector<4xf32>
    %102 = vector.shape_cast %101 : vector<4xf32> to vector<1x1x4xf32>
    %103 = vector.broadcast %102 : vector<1x1x4xf32> to vector<16x16x4xf32>
    %104 = arith.mulf %99, %103 : vector<16x16x4xf32>
    %105 = arith.addf %98, %104 : vector<16x16x4xf32>
    %106 = vector.extract_strided_slice %71 {offsets = [1, 0, 0], sizes = [16, 16, 4], strides = [1, 1, 1]} : vector<18x16x4xf32> to vector<16x16x4xf32>
    %107 = vector.extract_strided_slice %6 {offsets = [1, 1, 0], sizes = [1, 1, 4], strides = [1, 1, 1]} : vector<3x3x4xf32> to vector<1x1x4xf32>
    %108 = vector.shape_cast %107 : vector<1x1x4xf32> to vector<4xf32>
    %109 = vector.shape_cast %108 : vector<4xf32> to vector<1x1x4xf32>
    %110 = vector.broadcast %109 : vector<1x1x4xf32> to vector<16x16x4xf32>
    %111 = arith.mulf %106, %110 : vector<16x16x4xf32>
    %112 = arith.addf %105, %111 : vector<16x16x4xf32>
    %113 = vector.extract_strided_slice %76 {offsets = [1, 0, 0], sizes = [16, 16, 4], strides = [1, 1, 1]} : vector<18x16x4xf32> to vector<16x16x4xf32>
    %114 = vector.extract_strided_slice %6 {offsets = [1, 2, 0], sizes = [1, 1, 4], strides = [1, 1, 1]} : vector<3x3x4xf32> to vector<1x1x4xf32>
    %115 = vector.shape_cast %114 : vector<1x1x4xf32> to vector<4xf32>
    %116 = vector.shape_cast %115 : vector<4xf32> to vector<1x1x4xf32>
    %117 = vector.broadcast %116 : vector<1x1x4xf32> to vector<16x16x4xf32>
    %118 = arith.mulf %113, %117 : vector<16x16x4xf32>
    %119 = arith.addf %112, %118 : vector<16x16x4xf32>
    %120 = vector.extract_strided_slice %74 {offsets = [2, 0, 0], sizes = [16, 16, 4], strides = [1, 1, 1]} : vector<18x16x4xf32> to vector<16x16x4xf32>
    %121 = vector.extract_strided_slice %6 {offsets = [2, 0, 0], sizes = [1, 1, 4], strides = [1, 1, 1]} : vector<3x3x4xf32> to vector<1x1x4xf32>
    %122 = vector.shape_cast %121 : vector<1x1x4xf32> to vector<4xf32>
    %123 = vector.shape_cast %122 : vector<4xf32> to vector<1x1x4xf32>
    %124 = vector.broadcast %123 : vector<1x1x4xf32> to vector<16x16x4xf32>
    %125 = arith.mulf %120, %124 : vector<16x16x4xf32>
    %126 = arith.addf %119, %125 : vector<16x16x4xf32>
    %127 = vector.extract_strided_slice %71 {offsets = [2, 0, 0], sizes = [16, 16, 4], strides = [1, 1, 1]} : vector<18x16x4xf32> to vector<16x16x4xf32>
    %128 = vector.extract_strided_slice %6 {offsets = [2, 1, 0], sizes = [1, 1, 4], strides = [1, 1, 1]} : vector<3x3x4xf32> to vector<1x1x4xf32>
    %129 = vector.shape_cast %128 : vector<1x1x4xf32> to vector<4xf32>
    %130 = vector.shape_cast %129 : vector<4xf32> to vector<1x1x4xf32>
    %131 = vector.broadcast %130 : vector<1x1x4xf32> to vector<16x16x4xf32>
    %132 = arith.mulf %127, %131 : vector<16x16x4xf32>
    %133 = arith.addf %126, %132 : vector<16x16x4xf32>
    %134 = vector.extract_strided_slice %76 {offsets = [2, 0, 0], sizes = [16, 16, 4], strides = [1, 1, 1]} : vector<18x16x4xf32> to vector<16x16x4xf32>
    %135 = vector.extract_strided_slice %6 {offsets = [2, 2, 0], sizes = [1, 1, 4], strides = [1, 1, 1]} : vector<3x3x4xf32> to vector<1x1x4xf32>
    %136 = vector.shape_cast %135 : vector<1x1x4xf32> to vector<4xf32>
    %137 = vector.shape_cast %136 : vector<4xf32> to vector<1x1x4xf32>
    %138 = vector.broadcast %137 : vector<1x1x4xf32> to vector<16x16x4xf32>
    %139 = arith.mulf %134, %138 : vector<16x16x4xf32>
    %140 = arith.addf %133, %139 : vector<16x16x4xf32>
    %141 = vector.shape_cast %8 : vector<4xf32> to vector<1x1x4xf32>
    %142 = vector.broadcast %141 : vector<1x1x4xf32> to vector<16x16x4xf32>
    %143 = arith.mulf %140, %142 : vector<16x16x4xf32>
    %144 = vector.shape_cast %10 : vector<4xf32> to vector<1x1x4xf32>
    %145 = vector.broadcast %144 : vector<1x1x4xf32> to vector<16x16x4xf32>
    %146 = arith.addf %143, %145 : vector<16x16x4xf32>
    %cst_29 = arith.constant 0.000000e+00 : f32
    %147 = vector.broadcast %cst_29 : f32 to vector<16x16x4xf32>
    %148 = arith.maximumf %146, %147 : vector<16x16x4xf32>
    %149 = vector.extract_strided_slice %71 {offsets = [1, 0, 0], sizes = [16, 16, 4], strides = [1, 1, 1]} : vector<18x16x4xf32> to vector<16x16x4xf32>
    %150 = tpu.concatenate %149, %148 in 2 : vector<16x16x4xf32>, vector<16x16x4xf32> -> vector<16x16x8xf32>
    %c0_30 = arith.constant 0 : index
    %c0_31 = arith.constant 0 : index
    %c0_32 = arith.constant 0 : index
    %c0_33 = arith.constant 0 : index
    %151 = vector.load %arg11[%c0_30, %c0_31, %c0_32, %c0_33] : memref<1x16x16x8xf32, #tpu.memory_space<vmem>>, vector<1x16x16x8xf32>
    %152 = vector.shape_cast %151 : vector<1x16x16x8xf32> to vector<16x16x8xf32>
    %153 = vector.shape_cast %150 : vector<16x16x8xf32> to vector<1x16x16x8xf32>
    tpu.vector_store %arg11[%c0_30, %c0_31, %c0_32, %c0_33], %153 {strides = array<i32>} : memref<1x16x16x8xf32, #tpu.memory_space<vmem>>, vector<1x16x16x8xf32>,
    return
  }
  func.func @transform_0(%arg0: i32, %arg1: i32) -> (i32, i32, i32, i32) {
    %c0_i32 = arith.constant 0 : i32
    %c0_i32_0 = arith.constant 0 : i32
    %c0_i32_1 = arith.constant 0 : i32
    return %arg0, %arg1, %c0_i32, %c0_i32_0 : i32, i32, i32, i32
  }
  func.func @transform_1(%arg0: i32, %arg1: i32) -> (i32, i32, i32, i32) {
    %c16_i32 = arith.constant 16 : i32
    %0 = arith.muli %arg1, %c16_i32 : i32
    %c1_i32 = arith.constant 1 : i32
    %1 = arith.subi %0, %c1_i32 : i32
    %c0_i32 = arith.constant 0 : i32
    %2 = arith.maxsi %1, %c0_i32 : i32
    %c0_i32_0 = arith.constant 0 : i32
    %c0_i32_1 = arith.constant 0 : i32
    %c0_i32_2 = arith.constant 0 : i32
    return %arg0, %2, %c0_i32_0, %c0_i32_1 : i32, i32, i32, i32
  }
  func.func @transform_2(%arg0: i32, %arg1: i32) -> (i32, i32, i32, i32) {
    %c16_i32 = arith.constant 16 : i32
    %0 = arith.muli %arg1, %c16_i32 : i32
    %c16_i32_0 = arith.constant 16 : i32
    %1 = arith.addi %0, %c16_i32_0 : i32
    %c15_i32 = arith.constant 15 : i32
    %2 = arith.minsi %1, %c15_i32 : i32
    %c0_i32 = arith.constant 0 : i32
    %c0_i32_1 = arith.constant 0 : i32
    %c0_i32_2 = arith.constant 0 : i32
    return %arg0, %2, %c0_i32, %c0_i32_1 : i32, i32, i32, i32
  }
  func.func @transform_3(%arg0: i32, %arg1: i32) -> (i32, i32) {
    %c0_i32 = arith.constant 0 : i32
    %c0_i32_0 = arith.constant 0 : i32
    %c0_i32_1 = arith.constant 0 : i32
    return %c0_i32, %c0_i32_0 : i32, i32
  }
  func.func @transform_4(%arg0: i32, %arg1: i32) -> (i32, i32) {
    %c0_i32 = arith.constant 0 : i32
    %c0_i32_0 = arith.constant 0 : i32
    %c0_i32_1 = arith.constant 0 : i32
    return %c0_i32, %c0_i32_0 : i32, i32
  }
  func.func @transform_5(%arg0: i32, %arg1: i32) -> (i32, i32) {
    %c0_i32 = arith.constant 0 : i32
    %c0_i32_0 = arith.constant 0 : i32
    %c0_i32_1 = arith.constant 0 : i32
    return %c0_i32, %c0_i32_0 : i32, i32
  }
  func.func @transform_6(%arg0: i32, %arg1: i32) -> (i32, i32, i32) {
    %c0_i32 = arith.constant 0 : i32
    %c0_i32_0 = arith.constant 0 : i32
    %c0_i32_1 = arith.constant 0 : i32
    %c0_i32_2 = arith.constant 0 : i32
    return %c0_i32, %c0_i32_0, %c0_i32_1 : i32, i32, i32
  }
  func.func @transform_7(%arg0: i32, %arg1: i32) -> (i32, i32) {
    %c0_i32 = arith.constant 0 : i32
    %c0_i32_0 = arith.constant 0 : i32
    %c0_i32_1 = arith.constant 0 : i32
    return %c0_i32, %c0_i32_0 : i32, i32
  }
  func.func @transform_8(%arg0: i32, %arg1: i32) -> (i32, i32) {
    %c0_i32 = arith.constant 0 : i32
    %c0_i32_0 = arith.constant 0 : i32
    %c0_i32_1 = arith.constant 0 : i32
    return %c0_i32, %c0_i32_0 : i32, i32
  }
  func.func @transform_9(%arg0: i32, %arg1: i32) -> (i32, i32, i32, i32) {
    %c0_i32 = arith.constant 0 : i32
    %c0_i32_0 = arith.constant 0 : i32
    %c0_i32_1 = arith.constant 0 : i32
    return %arg0, %arg1, %c0_i32, %c0_i32_0 : i32, i32, i32, i32
  }
}

</mosaic_0001>

<llo_original>
// kernel: tpu_custom_call.1
$region0: #{tpu_custom_call.1}
  #allocation0 [shape = 'u32[]', space=smem, size = 0x4, offset = 0x4, fixed_abs, tag = 'smem constant byte address 0x4 - core index']
  #allocation1 [shape = 'u32[144,128]{1,0:T(1,128)}', space=vmem, size = 0x12000, scoped, tag = 'internal scratch']
  %s0 = inlined_call_operand.vmem [shape: f32[2,16,16,4], index: 0, kind: input, shape index: {}]
  %s1 = inlined_call_operand.vmem [shape: f32[2,16,16,4], index: 1, kind: input, shape index: {}]
  %s2 = inlined_call_operand.vmem [shape: f32[2,16,16,4], index: 2, kind: input, shape index: {}]
  %s3 = inlined_call_operand.vmem [shape: f32[4,4], index: 3, kind: input, shape index: {}]
  %s4 = inlined_call_operand.vmem [shape: f32[1,4], index: 4, kind: input, shape index: {}]
  %s5 = inlined_call_operand.vmem [shape: f32[1,4], index: 5, kind: input, shape index: {}]
  %s6 = inlined_call_operand.vmem [shape: f32[3,3,4], index: 6, kind: input, shape index: {}]
  %s7 = inlined_call_operand.vmem [shape: f32[1,4], index: 7, kind: input, shape index: {}]
  %s8 = inlined_call_operand.vmem [shape: f32[1,4], index: 8, kind: input, shape index: {}]
  %s9 = inlined_call_operand.vmem [shape: f32[2,16,16,8], index: 9, kind: output, shape index: {}]
  %s10 = sld [smem:[#allocation0]]
  $region69: #{tpu_custom_call.1} parent=0
    _
  %s12 = ssub.s32 1, %s10
  %s13 = scalar_select 0, %s12, %s10
  loop: start=0, step=1, limit=4
  $region2: #{tpu_custom_call.1} parent=0 // loop_pre_header
    _
  $region3: #{tpu_custom_call.1} parent=0 // loop_header
    %s15 = sphi 0, %s19
    %p16 = scmp.ge.s32.totalorder %s15, 4
    %s22 = sphi 0, %s34
    %s23 = sphi 0, %s30
    %s24 = sphi 0, %s22
    %s25 = sphi 0, %s23
    %s26 = sphi 0, %s24
    %s27 = sphi 0, %s25
    %s39 = sphi 0, %s41
    %s42 = sphi 0, %s39
    %s43 = sphi 0, %s42
    %s59 = sphi 0, %s43
    %s75 = sphi 0, %s77
    %s78 = sphi 0, %s75
    %s79 = sphi 0, %s78
    %s95 = sphi 0, %s79
    %s111 = sphi 0, %s113
    %s114 = sphi 0, %s111
    %s115 = sphi 0, %s114
    %s131 = sphi 0, %s115
    %s135 = sphi 0, %s135
    %s137 = sphi 0, %s135
    %s138 = sphi 0, %s137
    %s152 = sphi 0, %s138
    %s156 = sphi 0, %s156
    %s158 = sphi 0, %s156
    %s159 = sphi 0, %s158
    %s173 = sphi 0, %s159
    %s177 = sphi 0, %s177
    %s179 = sphi 0, %s177
    %s180 = sphi 0, %s179
    %s194 = sphi 0, %s180
    %s198 = sphi 0, %s198
    %s200 = sphi 0, %s198
    %s201 = sphi 0, %s200
    %s215 = sphi 0, %s201
    %s219 = sphi 0, %s219
    %s221 = sphi 0, %s219
    %s222 = sphi 0, %s221
    %s236 = sphi 0, %s222
    %s240 = sphi 0, %s240
    %s242 = sphi 0, %s240
    %s243 = sphi 0, %s242
    %s257 = sphi 0, %s243
    %s265 = sphi 0, %s267
    %s268 = sphi 0, %s265
    %s269 = sphi 0, %s268
    %s285 = sphi 0, %s269
  $region4: #{tpu_custom_call.1} parent=0 // loop_header_branch
    %18 = sbr.rel (%p16) target = $region8
  $region5: #{tpu_custom_call.1} parent=0 // loop_body
    %s20 = ssub.s32 %s15, 1
    %s21 = ssub.s32 %s15, 2
    %s28 = sadd.s32 1, %s23
    %p29 = scmp.ge.s32.totalorder %s28, 1
    %s30 = scalar_select %p29, 0, %s28
    %s31 = sadd.s32 1, %s22
    %s32 = scalar_select %p29, %s31, %s22
    %p33 = scmp.ge.s32.totalorder %s32, 2
    %s34 = scalar_select %p33, 0, %s32
    %s35 = ssub.s32 %s22, %s34
    %s36 = ssub.s32 %s23, %s30
    %s37 = sor.u32 %s35, %s36
    %p38 = scmp.eq.s32.totalorder %s37, 0
    %s40 = sadd.s32 %s39, 1
    %s41 = scalar_select %p38, %s39, %s40
    %p44 = pneg %p38
    %p45 = scmp.eq.s32.totalorder %s15, 1
    %p46 = por %p44, %p45
    %p47 = scmp.ne.s32.totalorder %s39, %s42
    %p48 = scmp.eq.s32.totalorder %s15, 0
    %p49 = por %p47, %p48
    %p50 = scmp.ne.s32.totalorder %s39, %s42
    %p51 = scmp.eq.s32.totalorder %s20, 1
    %p52 = por %p50, %p51
    %p53 = scmp.ne.s32.totalorder %s42, %s43
    %p54 = scmp.eq.s32.totalorder %s20, 0
    %p55 = por %p53, %p54
    %p56 = scmp.ne.s32.totalorder %s42, %s43
    %p57 = scmp.eq.s32.totalorder %s21, 1
    %p58 = por %p56, %p57
    %p60 = scmp.ne.s32.totalorder %s43, %s59
    %p61 = scmp.eq.s32.totalorder %s21, 0
    %p62 = por %p60, %p61
    %s63 = smul.u32 %s23, 16
    %s64 = ssub.s32 %s63, 1
    %p65 = scmp.gt.s32.totalorder %s64, 0
    %s66 = scalar_select %p65, %s64, 0
    %s67 = smul.u32 %s30, 16
    %s68 = ssub.s32 %s67, 1
    %p69 = scmp.gt.s32.totalorder %s68, 0
    %s70 = scalar_select %p69, %s68, 0
    %s71 = ssub.s32 %s22, %s34
    %s72 = ssub.s32 %s66, %s70
    %s73 = sor.u32 %s71, %s72
    %p74 = scmp.eq.s32.totalorder %s73, 0
    %s76 = sadd.s32 %s75, 1
    %s77 = scalar_select %p74, %s75, %s76
    %p80 = pneg %p74
    %p81 = scmp.eq.s32.totalorder %s15, 1
    %p82 = por %p80, %p81
    %p83 = scmp.ne.s32.totalorder %s75, %s78
    %p84 = scmp.eq.s32.totalorder %s15, 0
    %p85 = por %p83, %p84
    %p86 = scmp.ne.s32.totalorder %s75, %s78
    %p87 = scmp.eq.s32.totalorder %s20, 1
    %p88 = por %p86, %p87
    %p89 = scmp.ne.s32.totalorder %s78, %s79
    %p90 = scmp.eq.s32.totalorder %s20, 0
    %p91 = por %p89, %p90
    %p92 = scmp.ne.s32.totalorder %s78, %s79
    %p93 = scmp.eq.s32.totalorder %s21, 1
    %p94 = por %p92, %p93
    %p96 = scmp.ne.s32.totalorder %s79, %s95
    %p97 = scmp.eq.s32.totalorder %s21, 0
    %p98 = por %p96, %p97
    %s99 = smul.u32 %s23, 16
    %s100 = sadd.s32 %s99, 16
    %p101 = scmp.lt.s32.totalorder %s100, 15
    %s102 = scalar_select %p101, %s100, 15
    %s103 = smul.u32 %s30, 16
    %s104 = sadd.s32 %s103, 16
    %p105 = scmp.lt.s32.totalorder %s104, 15
    %s106 = scalar_select %p105, %s104, 15
    %s107 = ssub.s32 %s22, %s34
    %s108 = ssub.s32 %s102, %s106
    %s109 = sor.u32 %s107, %s108
    %p110 = scmp.eq.s32.totalorder %s109, 0
    %s112 = sadd.s32 %s111, 1
    %s113 = scalar_select %p110, %s111, %s112
    %p116 = pneg %p110
    %p117 = scmp.eq.s32.totalorder %s15, 1
    %p118 = por %p116, %p117
    %p119 = scmp.ne.s32.totalorder %s111, %s114
    %p120 = scmp.eq.s32.totalorder %s15, 0
    %p121 = por %p119, %p120
    %p122 = scmp.ne.s32.totalorder %s111, %s114
    %p123 = scmp.eq.s32.totalorder %s20, 1
    %p124 = por %p122, %p123
    %p125 = scmp.ne.s32.totalorder %s114, %s115
    %p126 = scmp.eq.s32.totalorder %s20, 0
    %p127 = por %p125, %p126
    %p128 = scmp.ne.s32.totalorder %s114, %s115
    %p129 = scmp.eq.s32.totalorder %s21, 1
    %p130 = por %p128, %p129
    %p132 = scmp.ne.s32.totalorder %s115, %s131
    %p133 = scmp.eq.s32.totalorder %s21, 0
    %p134 = por %p132, %p133
    %s136 = sadd.s32 %s135, 1
    %p139 = scmp.eq.s32.totalorder %s15, 1
    %p140 = scmp.ne.s32.totalorder %s135, %s137
    %p141 = scmp.eq.s32.totalorder %s15, 0
    %p142 = por %p140, %p141
    %p143 = scmp.ne.s32.totalorder %s135, %s137
    %p144 = scmp.eq.s32.totalorder %s20, 1
    %p145 = por %p143, %p144
    %p146 = scmp.ne.s32.totalorder %s137, %s138
    %p147 = scmp.eq.s32.totalorder %s20, 0
    %p148 = por %p146, %p147
    %p149 = scmp.ne.s32.totalorder %s137, %s138
    %p150 = scmp.eq.s32.totalorder %s21, 1
    %p151 = por %p149, %p150
    %p153 = scmp.ne.s32.totalorder %s138, %s152
    %p154 = scmp.eq.s32.totalorder %s21, 0
    %p155 = por %p153, %p154
    %s157 = sadd.s32 %s156, 1
    %p160 = scmp.eq.s32.totalorder %s15, 1
    %p161 = scmp.ne.s32.totalorder %s156, %s158
    %p162 = scmp.eq.s32.totalorder %s15, 0
    %p163 = por %p161, %p162
    %p164 = scmp.ne.s32.totalorder %s156, %s158
    %p165 = scmp.eq.s32.totalorder %s20, 1
    %p166 = por %p164, %p165
    %p167 = scmp.ne.s32.totalorder %s158, %s159
    %p168 = scmp.eq.s32.totalorder %s20, 0
    %p169 = por %p167, %p168
    %p170 = scmp.ne.s32.totalorder %s158, %s159
    %p171 = scmp.eq.s32.totalorder %s21, 1
    %p172 = por %p170, %p171
    %p174 = scmp.ne.s32.totalorder %s159, %s173
    %p175 = scmp.eq.s32.totalorder %s21, 0
    %p176 = por %p174, %p175
    %s178 = sadd.s32 %s177, 1
    %p181 = scmp.eq.s32.totalorder %s15, 1
    %p182 = scmp.ne.s32.totalorder %s177, %s179
    %p183 = scmp.eq.s32.totalorder %s15, 0
    %p184 = por %p182, %p183
    %p185 = scmp.ne.s32.totalorder %s177, %s179
    %p186 = scmp.eq.s32.totalorder %s20, 1
    %p187 = por %p185, %p186
    %p188 = scmp.ne.s32.totalorder %s179, %s180
    %p189 = scmp.eq.s32.totalorder %s20, 0
    %p190 = por %p188, %p189
    %p191 = scmp.ne.s32.totalorder %s179, %s180
    %p192 = scmp.eq.s32.totalorder %s21, 1
    %p193 = por %p191, %p192
    %p195 = scmp.ne.s32.totalorder %s180, %s194
    %p196 = scmp.eq.s32.totalorder %s21, 0
    %p197 = por %p195, %p196
    %s199 = sadd.s32 %s198, 1
    %p202 = scmp.eq.s32.totalorder %s15, 1
    %p203 = scmp.ne.s32.totalorder %s198, %s200
    %p204 = scmp.eq.s32.totalorder %s15, 0
    %p205 = por %p203, %p204
    %p206 = scmp.ne.s32.totalorder %s198, %s200
    %p207 = scmp.eq.s32.totalorder %s20, 1
    %p208 = por %p206, %p207
    %p209 = scmp.ne.s32.totalorder %s200, %s201
    %p210 = scmp.eq.s32.totalorder %s20, 0
    %p211 = por %p209, %p210
    %p212 = scmp.ne.s32.totalorder %s200, %s201
    %p213 = scmp.eq.s32.totalorder %s21, 1
    %p214 = por %p212, %p213
    %p216 = scmp.ne.s32.totalorder %s201, %s215
    %p217 = scmp.eq.s32.totalorder %s21, 0
    %p218 = por %p216, %p217
    %s220 = sadd.s32 %s219, 1
    %p223 = scmp.eq.s32.totalorder %s15, 1
    %p224 = scmp.ne.s32.totalorder %s219, %s221
    %p225 = scmp.eq.s32.totalorder %s15, 0
    %p226 = por %p224, %p225
    %p227 = scmp.ne.s32.totalorder %s219, %s221
    %p228 = scmp.eq.s32.totalorder %s20, 1
    %p229 = por %p227, %p228
    %p230 = scmp.ne.s32.totalorder %s221, %s222
    %p231 = scmp.eq.s32.totalorder %s20, 0
    %p232 = por %p230, %p231
    %p233 = scmp.ne.s32.totalorder %s221, %s222
    %p234 = scmp.eq.s32.totalorder %s21, 1
    %p235 = por %p233, %p234
    %p237 = scmp.ne.s32.totalorder %s222, %s236
    %p238 = scmp.eq.s32.totalorder %s21, 0
    %p239 = por %p237, %p238
    %s241 = sadd.s32 %s240, 1
    %p244 = scmp.eq.s32.totalorder %s15, 1
    %p245 = scmp.ne.s32.totalorder %s240, %s242
    %p246 = scmp.eq.s32.totalorder %s15, 0
    %p247 = por %p245, %p246
    %p248 = scmp.ne.s32.totalorder %s240, %s242
    %p249 = scmp.eq.s32.totalorder %s20, 1
    %p250 = por %p248, %p249
    %p251 = scmp.ne.s32.totalorder %s242, %s243
    %p252 = scmp.eq.s32.totalorder %s20, 0
    %p253 = por %p251, %p252
    %p254 = scmp.ne.s32.totalorder %s242, %s243
    %p255 = scmp.eq.s32.totalorder %s21, 1
    %p256 = por %p254, %p255
    %p258 = scmp.ne.s32.totalorder %s243, %s257
    %p259 = scmp.eq.s32.totalorder %s21, 0
    %p260 = por %p258, %p259
    %s261 = ssub.s32 %s22, %s34
    %s262 = ssub.s32 %s23, %s30
    %s263 = sor.u32 %s261, %s262
    %p264 = scmp.eq.s32.totalorder %s263, 0
    %s266 = sadd.s32 %s265, 1
    %s267 = scalar_select %p264, %s265, %s266
    %p270 = pneg %p264
    %p271 = scmp.eq.s32.totalorder %s15, 1
    %p272 = por %p270, %p271
    %p273 = scmp.ne.s32.totalorder %s265, %s268
    %p274 = scmp.eq.s32.totalorder %s15, 0
    %p275 = por %p273, %p274
    %p276 = scmp.ne.s32.totalorder %s265, %s268
    %p277 = scmp.eq.s32.totalorder %s20, 1
    %p278 = por %p276, %p277
    %p279 = scmp.ne.s32.totalorder %s268, %s269
    %p280 = scmp.eq.s32.totalorder %s20, 0
    %p281 = por %p279, %p280
    %p282 = scmp.ne.s32.totalorder %s268, %s269
    %p283 = scmp.eq.s32.totalorder %s21, 1
    %p284 = por %p282, %p283
    %p286 = scmp.ne.s32.totalorder %s269, %s285
    %p287 = scmp.eq.s32.totalorder %s21, 0
    %p288 = por %p286, %p287
    %p289 = scmp.le.s32.totalorder 1, %s15
    %p290 = scmp.lt.s32.totalorder %s15, 3
    %p291 = pnand %p289, %p290
    %p292 = pneg %p291
    // Predicated region
    $region9: #{tpu_custom_call.1} parent=5 // pred_check
      _
    $region10: #{tpu_custom_call.1} parent=5 // pred_check_branch
      %294 = sbr.rel (%p291) target = $region12
    $region11: #{tpu_custom_call.1} parent=5 // pred_region
      %s295 = ssub.s32 %s15, 1
      // Predicated region
      $region13: #{tpu_custom_call.1} parent=11 // pred_check
        %p296 = pneg %p148
      $region14: #{tpu_custom_call.1} parent=11 // pred_check_branch
        %298 = sbr.rel (%p296) target = $region16
      $region15: #{tpu_custom_call.1} parent=11 // pred_region
        _
      $region16: #{tpu_custom_call.1} parent=11 // pred_fallthru
        _
      // Predicated region
      $region17: #{tpu_custom_call.1} parent=11 // pred_check
        %p299 = pneg %p169
      $region18: #{tpu_custom_call.1} parent=11 // pred_check_branch
        %301 = sbr.rel (%p299) target = $region20
      $region19: #{tpu_custom_call.1} parent=11 // pred_region
        _
      $region20: #{tpu_custom_call.1} parent=11 // pred_fallthru
        _
      // Predicated region
      $region21: #{tpu_custom_call.1} parent=11 // pred_check
        %p302 = pneg %p190
      $region22: #{tpu_custom_call.1} parent=11 // pred_check_branch
        %304 = sbr.rel (%p302) target = $region24
      $region23: #{tpu_custom_call.1} parent=11 // pred_region
        _
      $region24: #{tpu_custom_call.1} parent=11 // pred_fallthru
        _
      // Predicated region
      $region25: #{tpu_custom_call.1} parent=11 // pred_check
        %p305 = pneg %p211
      $region26: #{tpu_custom_call.1} parent=11 // pred_check_branch
        %307 = sbr.rel (%p305) target = $region28
      $region27: #{tpu_custom_call.1} parent=11 // pred_region
        _
      $region28: #{tpu_custom_call.1} parent=11 // pred_fallthru
        _
      // Predicated region
      $region29: #{tpu_custom_call.1} parent=11 // pred_check
        %p308 = pneg %p232
      $region30: #{tpu_custom_call.1} parent=11 // pred_check_branch
        %310 = sbr.rel (%p308) target = $region32
      $region31: #{tpu_custom_call.1} parent=11 // pred_region
        _
      $region32: #{tpu_custom_call.1} parent=11 // pred_fallthru
        _
      // Predicated region
      $region33: #{tpu_custom_call.1} parent=11 // pred_check
        %p311 = pneg %p253
      $region34: #{tpu_custom_call.1} parent=11 // pred_check_branch
        %313 = sbr.rel (%p311) target = $region36
      $region35: #{tpu_custom_call.1} parent=11 // pred_region
        _
      $region36: #{tpu_custom_call.1} parent=11 // pred_fallthru
        _
    $region12: #{tpu_custom_call.1} parent=5 // pred_fallthru
      _
    %p314 = scmp.lt.s32.totalorder %s15, 2
    // Predicated region
    $region37: #{tpu_custom_call.1} parent=5 // pred_check
      %p315 = pneg %p314
    $region38: #{tpu_custom_call.1} parent=5 // pred_check_branch
      %317 = sbr.rel (%p315) target = $region40
    $region39: #{tpu_custom_call.1} parent=5 // pred_region
      // Predicated region
      $region41: #{tpu_custom_call.1} parent=39 // pred_check
        %p318 = pneg %p49
      $region42: #{tpu_custom_call.1} parent=39 // pred_check_branch
        %320 = sbr.rel (%p318) target = $region44
      $region43: #{tpu_custom_call.1} parent=39 // pred_region
        %s321 = smul.u32 16, %s23
        %p322 = scmp.lt.s32.totalorder %s22, 1
        %s323 = scalar_select %p322, %s22, 1
        %p324 = scmp.lt.s32.totalorder %s321, 15
        %s325 = scalar_select %p324, %s321, 15
        %s326 = smul.addr %s325, 2
        %s327 = smul.addr %s323, 32
        %s328 = sadd.s32 %s326, %s327
        %s329 = smul.addr %s328, 8
        %s330 = scalar_lea.vmem %s0, %s329
        %s331 = smul.u32 16, %s23
      $region44: #{tpu_custom_call.1} parent=39 // pred_fallthru
        _
      // Predicated region
      $region45: #{tpu_custom_call.1} parent=39 // pred_check
        %p332 = pneg %p85
      $region46: #{tpu_custom_call.1} parent=39 // pred_check_branch
        %334 = sbr.rel (%p332) target = $region48
      $region47: #{tpu_custom_call.1} parent=39 // pred_region
        %s335 = smul.u32 %s23, 16
        %s336 = ssub.s32 %s335, 1
        %p337 = scmp.gt.s32.totalorder %s336, 0
        %s338 = scalar_select %p337, %s336, 0
        %p339 = scmp.lt.s32.totalorder %s22, 1
        %s340 = scalar_select %p339, %s22, 1
        %p341 = scmp.lt.s32.totalorder %s338, 15
        %s342 = scalar_select %p341, %s338, 15
        %s343 = smul.addr %s342, 2
        %s344 = smul.addr %s340, 32
        %s345 = sadd.s32 %s343, %s344
        %s346 = smul.addr %s345, 8
        %s347 = scalar_lea.vmem %s1, %s346
        %s348 = smul.u32 %s23, 16
        %s349 = ssub.s32 %s348, 1
        %p350 = scmp.gt.s32.totalorder %s349, 0
        %s351 = scalar_select %p350, %s349, 0
      $region48: #{tpu_custom_call.1} parent=39 // pred_fallthru
        _
      // Predicated region
      $region49: #{tpu_custom_call.1} parent=39 // pred_check
        %p352 = pneg %p121
      $region50: #{tpu_custom_call.1} parent=39 // pred_check_branch
        %354 = sbr.rel (%p352) target = $region52
      $region51: #{tpu_custom_call.1} parent=39 // pred_region
        %s355 = smul.u32 %s23, 16
        %s356 = sadd.s32 %s355, 16
        %p357 = scmp.lt.s32.totalorder %s356, 15
        %s358 = scalar_select %p357, %s356, 15
        %p359 = scmp.lt.s32.totalorder %s22, 1
        %s360 = scalar_select %p359, %s22, 1
        %p361 = scmp.lt.s32.totalorder %s358, 15
        %s362 = scalar_select %p361, %s358, 15
        %s363 = smul.addr %s362, 2
        %s364 = smul.addr %s360, 32
        %s365 = sadd.s32 %s363, %s364
        %s366 = smul.addr %s365, 8
        %s367 = scalar_lea.vmem %s2, %s366
        %s368 = smul.u32 %s23, 16
        %s369 = sadd.s32 %s368, 16
        %p370 = scmp.lt.s32.totalorder %s369, 15
        %s371 = scalar_select %p370, %s369, 15
      $region52: #{tpu_custom_call.1} parent=39 // pred_fallthru
        _
    $region40: #{tpu_custom_call.1} parent=5 // pred_fallthru
      _
    %p372 = scmp.le.s32.totalorder 1, %s15
    %p373 = scmp.lt.s32.totalorder %s15, 3
    %p374 = pnand %p372, %p373
    %p375 = pneg %p374
    // Predicated region
    $region53: #{tpu_custom_call.1} parent=5 // pred_check
      _
    $region54: #{tpu_custom_call.1} parent=5 // pred_check_branch
      %377 = sbr.rel (%p374) target = $region56
    $region55: #{tpu_custom_call.1} parent=5 // pred_region
      %s378 = ssub.s32 %s15, 1
      %s379 = smul.u32 16, %s25
      %p380 = scmp.lt.s32.totalorder %s24, 1
      %s381 = scalar_select %p380, %s24, 1
      %p382 = scmp.lt.s32.totalorder %s379, 15
      %s383 = scalar_select %p382, %s379, 15
      %s384 = smul.addr %s383, 2
      %s385 = smul.addr %s381, 32
      %s386 = sadd.s32 %s384, %s385
      %s387 = smul.addr %s386, 8
      %s388 = scalar_lea.vmem %s0, %s387
      %p389 = pneg %p55
      %p390 = pneg %p52
      %s391 = smul.u32 %s25, 16
      %s392 = ssub.s32 %s391, 1
      %p393 = scmp.gt.s32.totalorder %s392, 0
      %s394 = scalar_select %p393, %s392, 0
      %p395 = scmp.lt.s32.totalorder %s24, 1
      %s396 = scalar_select %p395, %s24, 1
      %p397 = scmp.lt.s32.totalorder %s394, 15
      %s398 = scalar_select %p397, %s394, 15
      %s399 = smul.addr %s398, 2
      %s400 = smul.addr %s396, 32
      %s401 = sadd.s32 %s399, %s400
      %s402 = smul.addr %s401, 8
      %s403 = scalar_lea.vmem %s1, %s402
      %p404 = pneg %p91
      %p405 = pneg %p88
      %s406 = smul.u32 %s25, 16
      %s407 = sadd.s32 %s406, 16
      %p408 = scmp.lt.s32.totalorder %s407, 15
      %s409 = scalar_select %p408, %s407, 15
      %p410 = scmp.lt.s32.totalorder %s24, 1
      %s411 = scalar_select %p410, %s24, 1
      %p412 = scmp.lt.s32.totalorder %s409, 15
      %s413 = scalar_select %p412, %s409, 15
      %s414 = smul.addr %s413, 2
      %s415 = smul.addr %s411, 32
      %s416 = sadd.s32 %s414, %s415
      %s417 = smul.addr %s416, 8
      %s418 = scalar_lea.vmem %s2, %s417
      %p419 = pneg %p127
      %p420 = pneg %p124
      %p421 = pneg %p148
      %p422 = pneg %p145
      %p423 = pneg %p169
      %p424 = pneg %p166
      %p425 = pneg %p190
      %p426 = pneg %p187
      %p427 = pneg %p211
      %p428 = pneg %p208
      %p429 = pneg %p232
      %p430 = pneg %p229
      %p431 = pneg %p253
      %p432 = pneg %p250
      %p433 = pneg %p281
      %p434 = pneg %p278
      %s435 = smul.u32 16, %s25
      %p436 = scmp.lt.s32.totalorder %s24, 1
      %s437 = scalar_select %p436, %s24, 1
      %p438 = scmp.lt.s32.totalorder %s435, 15
      %s439 = scalar_select %p438, %s435, 15
      %s440 = smul.addr %s439, 2
      %s441 = smul.addr %s437, 32
      %s442 = sadd.s32 %s440, %s441
      %s443 = smul.addr %s442, 8
      %s444 = scalar_lea.vmem %s9, %s443
      %s445 = smul.u32 16, %s25
      %p446 = scmp.lt.s32.totalorder %s24, 1
      %s447 = scalar_select %p446, %s24, 1
      %p448 = scmp.lt.s32.totalorder %s445, 15
      %s449 = scalar_select %p448, %s445, 15
      %s450 = smul.addr %s449, 2
      %s451 = smul.addr %s447, 32
      %s452 = sadd.s32 %s450, %s451
      %s453 = smul.addr %s452, 8
      %s454 = scalar_lea.vmem %s0, %s453
      %s455 = smul.u32 16, %s25
      %s456 = smul.u32 %s25, 16
      %s457 = ssub.s32 %s456, 1
      %p458 = scmp.gt.s32.totalorder %s457, 0
      %s459 = scalar_select %p458, %s457, 0
      %p460 = scmp.lt.s32.totalorder %s24, 1
      %s461 = scalar_select %p460, %s24, 1
      %p462 = scmp.lt.s32.totalorder %s459, 15
      %s463 = scalar_select %p462, %s459, 15
      %s464 = smul.addr %s463, 2
      %s465 = smul.addr %s461, 32
      %s466 = sadd.s32 %s464, %s465
      %s467 = smul.addr %s466, 8
      %s468 = scalar_lea.vmem %s1, %s467
      %s469 = smul.u32 %s25, 16
      %s470 = ssub.s32 %s469, 1
      %p471 = scmp.gt.s32.totalorder %s470, 0
      %s472 = scalar_select %p471, %s470, 0
      %s473 = smul.u32 %s25, 16
      %s474 = sadd.s32 %s473, 16
      %p475 = scmp.lt.s32.totalorder %s474, 15
      %s476 = scalar_select %p475, %s474, 15
      %p477 = scmp.lt.s32.totalorder %s24, 1
      %s478 = scalar_select %p477, %s24, 1
      %p479 = scmp.lt.s32.totalorder %s476, 15
      %s480 = scalar_select %p479, %s476, 15
      %s481 = smul.addr %s480, 2
      %s482 = smul.addr %s478, 32
      %s483 = sadd.s32 %s481, %s482
      %s484 = smul.addr %s483, 8
      %s485 = scalar_lea.vmem %s2, %s484
      %s486 = smul.u32 %s25, 16
      %s487 = sadd.s32 %s486, 16
      %p488 = scmp.lt.s32.totalorder %s487, 15
      %s489 = scalar_select %p488, %s487, 15
      %s490 = smul.u32 16, %s25
      %p491 = scmp.lt.s32.totalorder %s24, 1
      %s492 = scalar_select %p491, %s24, 1
      %p493 = scmp.lt.s32.totalorder %s490, 15
      %s494 = scalar_select %p493, %s490, 15
      %s495 = smul.addr %s494, 2
      %s496 = smul.addr %s492, 32
      %s497 = sadd.s32 %s495, %s496
      %s498 = smul.addr %s497, 8
      %s499 = scalar_lea.vmem %s9, %s498
      %s500 = smul.u32 16, %s25
      %s501 = smul.u32 %s25, 16
      %v502 = vld [vmem:[%s3] sm:$0xf]
      %v503 = vld [vmem:[%s4] sm:$0x1]
      %v504 = vld [vmem:[%s5] sm:$0x1]
      %v505 = vld [vmem:[%s6] sm:$0x7]
      %v506 = vld [vmem:[%s6 + $0x4] sm:$0x7]
      %v507 = vld [vmem:[%s6 + $0x8] sm:$0x7]
      %v508 = vld [vmem:[%s7] sm:$0x1]
      %v509 = vld [vmem:[%s8] sm:$0x1]
      %v510 = vld [vmem:[%s468] sm:$0xff]
      %v511 = vld [vmem:[%s468 + $0x8] sm:$0xff]
      %v512 = vld [vmem:[%s454] sm:$0xff]
      %v513 = vld [vmem:[%s454 + $0x8] sm:$0xff]
      %v514 = vld [vmem:[%s454 + $0x10] sm:$0xff]
      %v515 = vld [vmem:[%s454 + $0x18] sm:$0xff]
      %v516 = vld [vmem:[%s454 + $0x20] sm:$0xff]
      %v517 = vld [vmem:[%s454 + $0x28] sm:$0xff]
      %v518 = vld [vmem:[%s454 + $0x30] sm:$0xff]
      %v519 = vld [vmem:[%s454 + $0x38] sm:$0xff]
      %v520 = vld [vmem:[%s454 + $0x40] sm:$0xff]
      %v521 = vld [vmem:[%s454 + $0x48] sm:$0xff]
      %v522 = vld [vmem:[%s454 + $0x50] sm:$0xff]
      %v523 = vld [vmem:[%s454 + $0x58] sm:$0xff]
      %v524 = vld [vmem:[%s454 + $0x60] sm:$0xff]
      %v525 = vld [vmem:[%s454 + $0x68] sm:$0xff]
      %v526 = vld [vmem:[%s454 + $0x70] sm:$0xff]
      %v527 = vld [vmem:[%s454 + $0x78] sm:$0xff]
      %v528 = vld [vmem:[%s454 + $0x80] sm:$0xff]
      %v529 = vld [vmem:[%s454 + $0x88] sm:$0xff]
      %v530 = vld [vmem:[%s454 + $0x90] sm:$0xff]
      %v531 = vld [vmem:[%s454 + $0x98] sm:$0xff]
      %v532 = vld [vmem:[%s454 + $0xa0] sm:$0xff]
      %v533 = vld [vmem:[%s454 + $0xa8] sm:$0xff]
      %v534 = vld [vmem:[%s454 + $0xb0] sm:$0xff]
      %v535 = vld [vmem:[%s454 + $0xb8] sm:$0xff]
      %v536 = vld [vmem:[%s454 + $0xc0] sm:$0xff]
      %v537 = vld [vmem:[%s454 + $0xc8] sm:$0xff]
      %v538 = vld [vmem:[%s454 + $0xd0] sm:$0xff]
      %v539 = vld [vmem:[%s454 + $0xd8] sm:$0xff]
      %v540 = vld [vmem:[%s454 + $0xe0] sm:$0xff]
      %v541 = vld [vmem:[%s454 + $0xe8] sm:$0xff]
      %v542 = vld [vmem:[%s454 + $0xf0] sm:$0xff]
      %v543 = vld [vmem:[%s454 + $0xf8] sm:$0xff]
      %v544 = vld [vmem:[%s485] sm:$0xff]
      %v545 = vld [vmem:[%s485 + $0x8] sm:$0xff]
      %547 = vset.pattern.permute.xlu0 0
      %548 = vperm.xlu0 %547, %v510
      %v549 = vpop.permute.xlu0 %548
      %552 = vset.pattern.permute.xlu0 0
      %553 = vperm.xlu0 %552, %v511
      %v554 = vpop.permute.xlu0 %553
      %557 = vset.pattern.permute.xlu0 0
      %558 = vperm.xlu0 %557, %v512
      %v559 = vpop.permute.xlu0 %558
      %562 = vset.pattern.permute.xlu0 0
      %563 = vperm.xlu0 %562, %v513
      %v564 = vpop.permute.xlu0 %563
      %567 = vset.pattern.permute.xlu0 0
      %568 = vperm.xlu0 %567, %v514
      %v569 = vpop.permute.xlu0 %568
      %572 = vset.pattern.permute.xlu0 0
      %573 = vperm.xlu0 %572, %v515
      %v574 = vpop.permute.xlu0 %573
      %577 = vset.pattern.permute.xlu0 0
      %578 = vperm.xlu0 %577, %v516
      %v579 = vpop.permute.xlu0 %578
      %582 = vset.pattern.permute.xlu0 0
      %583 = vperm.xlu0 %582, %v517
      %v584 = vpop.permute.xlu0 %583
      %587 = vset.pattern.permute.xlu0 0
      %588 = vperm.xlu0 %587, %v518
      %v589 = vpop.permute.xlu0 %588
      %592 = vset.pattern.permute.xlu0 0
      %593 = vperm.xlu0 %592, %v519
      %v594 = vpop.permute.xlu0 %593
      %597 = vset.pattern.permute.xlu0 0
      %598 = vperm.xlu0 %597, %v520
      %v599 = vpop.permute.xlu0 %598
      %602 = vset.pattern.permute.xlu0 0
      %603 = vperm.xlu0 %602, %v521
      %v604 = vpop.permute.xlu0 %603
      %607 = vset.pattern.permute.xlu0 0
      %608 = vperm.xlu0 %607, %v522
      %v609 = vpop.permute.xlu0 %608
      %612 = vset.pattern.permute.xlu0 0
      %613 = vperm.xlu0 %612, %v523
      %v614 = vpop.permute.xlu0 %613
      %617 = vset.pattern.permute.xlu0 0
      %618 = vperm.xlu0 %617, %v524
      %v619 = vpop.permute.xlu0 %618
      %622 = vset.pattern.permute.xlu0 0
      %623 = vperm.xlu0 %622, %v525
      %v624 = vpop.permute.xlu0 %623
      %627 = vset.pattern.permute.xlu0 0
      %628 = vperm.xlu0 %627, %v526
      %v629 = vpop.permute.xlu0 %628
      %632 = vset.pattern.permute.xlu0 0
      %633 = vperm.xlu0 %632, %v527
      %v634 = vpop.permute.xlu0 %633
      %637 = vset.pattern.permute.xlu0 0
      %638 = vperm.xlu0 %637, %v528
      %v639 = vpop.permute.xlu0 %638
      %642 = vset.pattern.permute.xlu0 0
      %643 = vperm.xlu0 %642, %v529
      %v644 = vpop.permute.xlu0 %643
      %647 = vset.pattern.permute.xlu0 0
      %648 = vperm.xlu0 %647, %v530
      %v649 = vpop.permute.xlu0 %648
      %652 = vset.pattern.permute.xlu0 0
      %653 = vperm.xlu0 %652, %v531
      %v654 = vpop.permute.xlu0 %653
      %657 = vset.pattern.permute.xlu0 0
      %658 = vperm.xlu0 %657, %v532
      %v659 = vpop.permute.xlu0 %658
      %662 = vset.pattern.permute.xlu0 0
      %663 = vperm.xlu0 %662, %v533
      %v664 = vpop.permute.xlu0 %663
      %667 = vset.pattern.permute.xlu0 0
      %668 = vperm.xlu0 %667, %v534
      %v669 = vpop.permute.xlu0 %668
      %672 = vset.pattern.permute.xlu0 0
      %673 = vperm.xlu0 %672, %v535
      %v674 = vpop.permute.xlu0 %673
      %677 = vset.pattern.permute.xlu0 0
      %678 = vperm.xlu0 %677, %v536
      %v679 = vpop.permute.xlu0 %678
      %682 = vset.pattern.permute.xlu0 0
      %683 = vperm.xlu0 %682, %v537
      %v684 = vpop.permute.xlu0 %683
      %687 = vset.pattern.permute.xlu0 0
      %688 = vperm.xlu0 %687, %v538
      %v689 = vpop.permute.xlu0 %688
      %692 = vset.pattern.permute.xlu0 0
      %693 = vperm.xlu0 %692, %v539
      %v694 = vpop.permute.xlu0 %693
      %697 = vset.pattern.permute.xlu0 0
      %698 = vperm.xlu0 %697, %v540
      %v699 = vpop.permute.xlu0 %698
      %702 = vset.pattern.permute.xlu0 0
      %703 = vperm.xlu0 %702, %v541
      %v704 = vpop.permute.xlu0 %703
      %707 = vset.pattern.permute.xlu0 0
      %708 = vperm.xlu0 %707, %v542
      %v709 = vpop.permute.xlu0 %708
      %712 = vset.pattern.permute.xlu0 0
      %713 = vperm.xlu0 %712, %v543
      %v714 = vpop.permute.xlu0 %713
      %717 = vset.pattern.permute.xlu0 0
      %718 = vperm.xlu0 %717, %v544
      %v719 = vpop.permute.xlu0 %718
      %722 = vset.pattern.permute.xlu0 0
      %723 = vperm.xlu0 %722, %v545
      %v724 = vpop.permute.xlu0 %723
      %v726 = vlaneseq
      %v727 = vshrl.u32 %v726, 7
      %v728 = vsub.s32 0, %v727
      %v729 = vrot.slane %v502, %v728
      %v730 = vmul.f32 %v549, %v729
      %v731 = vmul.f32 %v554, %v729
      %v732 = vmul.f32 %v559, %v729
      %v733 = vmul.f32 %v564, %v729
      %v734 = vmul.f32 %v569, %v729
      %v735 = vmul.f32 %v574, %v729
      %v736 = vmul.f32 %v579, %v729
      %v737 = vmul.f32 %v584, %v729
      %v738 = vmul.f32 %v589, %v729
      %v739 = vmul.f32 %v594, %v729
      %v740 = vmul.f32 %v599, %v729
      %v741 = vmul.f32 %v604, %v729
      %v742 = vmul.f32 %v609, %v729
      %v743 = vmul.f32 %v614, %v729
      %v744 = vmul.f32 %v619, %v729
      %v745 = vmul.f32 %v624, %v729
      %v746 = vmul.f32 %v629, %v729
      %v747 = vmul.f32 %v634, %v729
      %v748 = vmul.f32 %v639, %v729
      %v749 = vmul.f32 %v644, %v729
      %v750 = vmul.f32 %v649, %v729
      %v751 = vmul.f32 %v654, %v729
      %v752 = vmul.f32 %v659, %v729
      %v753 = vmul.f32 %v664, %v729
      %v754 = vmul.f32 %v669, %v729
      %v755 = vmul.f32 %v674, %v729
      %v756 = vmul.f32 %v679, %v729
      %v757 = vmul.f32 %v684, %v729
      %v758 = vmul.f32 %v689, %v729
      %v759 = vmul.f32 %v694, %v729
      %v760 = vmul.f32 %v699, %v729
      %v761 = vmul.f32 %v704, %v729
      %v762 = vmul.f32 %v709, %v729
      %v763 = vmul.f32 %v714, %v729
      %v764 = vmul.f32 %v719, %v729
      %v765 = vmul.f32 %v724, %v729
      %v766 = vadd.f32 %v730, 0.0
      %v767 = vadd.f32 %v731, 0.0
      %v768 = vadd.f32 %v732, 0.0
      %v769 = vadd.f32 %v733, 0.0
      %v770 = vadd.f32 %v734, 0.0
      %v771 = vadd.f32 %v735, 0.0
      %v772 = vadd.f32 %v736, 0.0
      %v773 = vadd.f32 %v737, 0.0
      %v774 = vadd.f32 %v738, 0.0
      %v775 = vadd.f32 %v739, 0.0
      %v776 = vadd.f32 %v740, 0.0
      %v777 = vadd.f32 %v741, 0.0
      %v778 = vadd.f32 %v742, 0.0
      %v779 = vadd.f32 %v743, 0.0
      %v780 = vadd.f32 %v744, 0.0
      %v781 = vadd.f32 %v745, 0.0
      %v782 = vadd.f32 %v746, 0.0
      %v783 = vadd.f32 %v747, 0.0
      %v784 = vadd.f32 %v748, 0.0
      %v785 = vadd.f32 %v749, 0.0
      %v786 = vadd.f32 %v750, 0.0
      %v787 = vadd.f32 %v751, 0.0
      %v788 = vadd.f32 %v752, 0.0
      %v789 = vadd.f32 %v753, 0.0
      %v790 = vadd.f32 %v754, 0.0
      %v791 = vadd.f32 %v755, 0.0
      %v792 = vadd.f32 %v756, 0.0
      %v793 = vadd.f32 %v757, 0.0
      %v794 = vadd.f32 %v758, 0.0
      %v795 = vadd.f32 %v759, 0.0
      %v796 = vadd.f32 %v760, 0.0
      %v797 = vadd.f32 %v761, 0.0
      %v798 = vadd.f32 %v762, 0.0
      %v799 = vadd.f32 %v763, 0.0
      %v800 = vadd.f32 %v764, 0.0
      %v801 = vadd.f32 %v765, 0.0
      %802 = vset.pattern.permute.xlu0 1
      %803 = vperm.xlu0 %802, %v510
      %v804 = vpop.permute.xlu0 %803
      %806 = vset.pattern.permute.xlu0 1
      %807 = vperm.xlu0 %806, %v511
      %v808 = vpop.permute.xlu0 %807
      %810 = vset.pattern.permute.xlu0 1
      %811 = vperm.xlu0 %810, %v512
      %v812 = vpop.permute.xlu0 %811
      %814 = vset.pattern.permute.xlu0 1
      %815 = vperm.xlu0 %814, %v513
      %v816 = vpop.permute.xlu0 %815
      %818 = vset.pattern.permute.xlu0 1
      %819 = vperm.xlu0 %818, %v514
      %v820 = vpop.permute.xlu0 %819
      %822 = vset.pattern.permute.xlu0 1
      %823 = vperm.xlu0 %822, %v515
      %v824 = vpop.permute.xlu0 %823
      %826 = vset.pattern.permute.xlu0 1
      %827 = vperm.xlu0 %826, %v516
      %v828 = vpop.permute.xlu0 %827
      %830 = vset.pattern.permute.xlu0 1
      %831 = vperm.xlu0 %830, %v517
      %v832 = vpop.permute.xlu0 %831
      %834 = vset.pattern.permute.xlu0 1
      %835 = vperm.xlu0 %834, %v518
      %v836 = vpop.permute.xlu0 %835
      %838 = vset.pattern.permute.xlu0 1
      %839 = vperm.xlu0 %838, %v519
      %v840 = vpop.permute.xlu0 %839
      %842 = vset.pattern.permute.xlu0 1
      %843 = vperm.xlu0 %842, %v520
      %v844 = vpop.permute.xlu0 %843
      %846 = vset.pattern.permute.xlu0 1
      %847 = vperm.xlu0 %846, %v521
      %v848 = vpop.permute.xlu0 %847
      %850 = vset.pattern.permute.xlu0 1
      %851 = vperm.xlu0 %850, %v522
      %v852 = vpop.permute.xlu0 %851
      %854 = vset.pattern.permute.xlu0 1
      %855 = vperm.xlu0 %854, %v523
      %v856 = vpop.permute.xlu0 %855
      %858 = vset.pattern.permute.xlu0 1
      %859 = vperm.xlu0 %858, %v524
      %v860 = vpop.permute.xlu0 %859
      %862 = vset.pattern.permute.xlu0 1
      %863 = vperm.xlu0 %862, %v525
      %v864 = vpop.permute.xlu0 %863
      %866 = vset.pattern.permute.xlu0 1
      %867 = vperm.xlu0 %866, %v526
      %v868 = vpop.permute.xlu0 %867
      %870 = vset.pattern.permute.xlu0 1
      %871 = vperm.xlu0 %870, %v527
      %v872 = vpop.permute.xlu0 %871
      %874 = vset.pattern.permute.xlu0 1
      %875 = vperm.xlu0 %874, %v528
      %v876 = vpop.permute.xlu0 %875
      %878 = vset.pattern.permute.xlu0 1
      %879 = vperm.xlu0 %878, %v529
      %v880 = vpop.permute.xlu0 %879
      %882 = vset.pattern.permute.xlu0 1
      %883 = vperm.xlu0 %882, %v530
      %v884 = vpop.permute.xlu0 %883
      %886 = vset.pattern.permute.xlu0 1
      %887 = vperm.xlu0 %886, %v531
      %v888 = vpop.permute.xlu0 %887
      %890 = vset.pattern.permute.xlu0 1
      %891 = vperm.xlu0 %890, %v532
      %v892 = vpop.permute.xlu0 %891
      %894 = vset.pattern.permute.xlu0 1
      %895 = vperm.xlu0 %894, %v533
      %v896 = vpop.permute.xlu0 %895
      %898 = vset.pattern.permute.xlu0 1
      %899 = vperm.xlu0 %898, %v534
      %v900 = vpop.permute.xlu0 %899
      %902 = vset.pattern.permute.xlu0 1
      %903 = vperm.xlu0 %902, %v535
      %v904 = vpop.permute.xlu0 %903
      %906 = vset.pattern.permute.xlu0 1
      %907 = vperm.xlu0 %906, %v536
      %v908 = vpop.permute.xlu0 %907
      %910 = vset.pattern.permute.xlu0 1
      %911 = vperm.xlu0 %910, %v537
      %v912 = vpop.permute.xlu0 %911
      %914 = vset.pattern.permute.xlu0 1
      %915 = vperm.xlu0 %914, %v538
      %v916 = vpop.permute.xlu0 %915
      %918 = vset.pattern.permute.xlu0 1
      %919 = vperm.xlu0 %918, %v539
      %v920 = vpop.permute.xlu0 %919
      %922 = vset.pattern.permute.xlu0 1
      %923 = vperm.xlu0 %922, %v540
      %v924 = vpop.permute.xlu0 %923
      %926 = vset.pattern.permute.xlu0 1
      %927 = vperm.xlu0 %926, %v541
      %v928 = vpop.permute.xlu0 %927
      %930 = vset.pattern.permute.xlu0 1
      %931 = vperm.xlu0 %930, %v542
      %v932 = vpop.permute.xlu0 %931
      %934 = vset.pattern.permute.xlu0 1
      %935 = vperm.xlu0 %934, %v543
      %v936 = vpop.permute.xlu0 %935
      %938 = vset.pattern.permute.xlu0 1
      %939 = vperm.xlu0 %938, %v544
      %v940 = vpop.permute.xlu0 %939
      %942 = vset.pattern.permute.xlu0 1
      %943 = vperm.xlu0 %942, %v545
      %v944 = vpop.permute.xlu0 %943
      %v946 = vlaneseq
      %v947 = vshrl.u32 %v946, 7
      %v948 = vsub.s32 1, %v947
      %v949 = vrot.slane %v502, %v948
      %v950 = vmul.f32 %v804, %v949
      %v951 = vmul.f32 %v808, %v949
      %v952 = vmul.f32 %v812, %v949
      %v953 = vmul.f32 %v816, %v949
      %v954 = vmul.f32 %v820, %v949
      %v955 = vmul.f32 %v824, %v949
      %v956 = vmul.f32 %v828, %v949
      %v957 = vmul.f32 %v832, %v949
      %v958 = vmul.f32 %v836, %v949
      %v959 = vmul.f32 %v840, %v949
      %v960 = vmul.f32 %v844, %v949
      %v961 = vmul.f32 %v848, %v949
      %v962 = vmul.f32 %v852, %v949
      %v963 = vmul.f32 %v856, %v949
      %v964 = vmul.f32 %v860, %v949
      %v965 = vmul.f32 %v864, %v949
      %v966 = vmul.f32 %v868, %v949
      %v967 = vmul.f32 %v872, %v949
      %v968 = vmul.f32 %v876, %v949
      %v969 = vmul.f32 %v880, %v949
      %v970 = vmul.f32 %v884, %v949
      %v971 = vmul.f32 %v888, %v949
      %v972 = vmul.f32 %v892, %v949
      %v973 = vmul.f32 %v896, %v949
      %v974 = vmul.f32 %v900, %v949
      %v975 = vmul.f32 %v904, %v949
      %v976 = vmul.f32 %v908, %v949
      %v977 = vmul.f32 %v912, %v949
      %v978 = vmul.f32 %v916, %v949
      %v979 = vmul.f32 %v920, %v949
      %v980 = vmul.f32 %v924, %v949
      %v981 = vmul.f32 %v928, %v949
      %v982 = vmul.f32 %v932, %v949
      %v983 = vmul.f32 %v936, %v949
      %v984 = vmul.f32 %v940, %v949
      %v985 = vmul.f32 %v944, %v949
      %v986 = vadd.f32 %v766, %v950
      %v987 = vadd.f32 %v767, %v951
      %v988 = vadd.f32 %v768, %v952
      %v989 = vadd.f32 %v769, %v953
      %v990 = vadd.f32 %v770, %v954
      %v991 = vadd.f32 %v771, %v955
      %v992 = vadd.f32 %v772, %v956
      %v993 = vadd.f32 %v773, %v957
      %v994 = vadd.f32 %v774, %v958
      %v995 = vadd.f32 %v775, %v959
      %v996 = vadd.f32 %v776, %v960
      %v997 = vadd.f32 %v777, %v961
      %v998 = vadd.f32 %v778, %v962
      %v999 = vadd.f32 %v779, %v963
      %v1000 = vadd.f32 %v780, %v964
      %v1001 = vadd.f32 %v781, %v965
      %v1002 = vadd.f32 %v782, %v966
      %v1003 = vadd.f32 %v783, %v967
      %v1004 = vadd.f32 %v784, %v968
      %v1005 = vadd.f32 %v785, %v969
      %v1006 = vadd.f32 %v786, %v970
      %v1007 = vadd.f32 %v787, %v971
      %v1008 = vadd.f32 %v788, %v972
      %v1009 = vadd.f32 %v789, %v973
      %v1010 = vadd.f32 %v790, %v974
      %v1011 = vadd.f32 %v791, %v975
      %v1012 = vadd.f32 %v792, %v976
      %v1013 = vadd.f32 %v793, %v977
      %v1014 = vadd.f32 %v794, %v978
      %v1015 = vadd.f32 %v795, %v979
      %v1016 = vadd.f32 %v796, %v980
      %v1017 = vadd.f32 %v797, %v981
      %v1018 = vadd.f32 %v798, %v982
      %v1019 = vadd.f32 %v799, %v983
      %v1020 = vadd.f32 %v800, %v984
      %v1021 = vadd.f32 %v801, %v985
      %1022 = vset.pattern.permute.xlu0 2
      %1023 = vperm.xlu0 %1022, %v510
      %v1024 = vpop.permute.xlu0 %1023
      %1026 = vset.pattern.permute.xlu0 2
      %1027 = vperm.xlu0 %1026, %v511
      %v1028 = vpop.permute.xlu0 %1027
      %1030 = vset.pattern.permute.xlu0 2
      %1031 = vperm.xlu0 %1030, %v512
      %v1032 = vpop.permute.xlu0 %1031
      %1034 = vset.pattern.permute.xlu0 2
      %1035 = vperm.xlu0 %1034, %v513
      %v1036 = vpop.permute.xlu0 %1035
      %1038 = vset.pattern.permute.xlu0 2
      %1039 = vperm.xlu0 %1038, %v514
      %v1040 = vpop.permute.xlu0 %1039
      %1042 = vset.pattern.permute.xlu0 2
      %1043 = vperm.xlu0 %1042, %v515
      %v1044 = vpop.permute.xlu0 %1043
      %1046 = vset.pattern.permute.xlu0 2
      %1047 = vperm.xlu0 %1046, %v516
      %v1048 = vpop.permute.xlu0 %1047
      %1050 = vset.pattern.permute.xlu0 2
      %1051 = vperm.xlu0 %1050, %v517
      %v1052 = vpop.permute.xlu0 %1051
      %1054 = vset.pattern.permute.xlu0 2
      %1055 = vperm.xlu0 %1054, %v518
      %v1056 = vpop.permute.xlu0 %1055
      %1058 = vset.pattern.permute.xlu0 2
      %1059 = vperm.xlu0 %1058, %v519
      %v1060 = vpop.permute.xlu0 %1059
      %1062 = vset.pattern.permute.xlu0 2
      %1063 = vperm.xlu0 %1062, %v520
      %v1064 = vpop.permute.xlu0 %1063
      %1066 = vset.pattern.permute.xlu0 2
      %1067 = vperm.xlu0 %1066, %v521
      %v1068 = vpop.permute.xlu0 %1067
      %1070 = vset.pattern.permute.xlu0 2
      %1071 = vperm.xlu0 %1070, %v522
      %v1072 = vpop.permute.xlu0 %1071
      %1074 = vset.pattern.permute.xlu0 2
      %1075 = vperm.xlu0 %1074, %v523
      %v1076 = vpop.permute.xlu0 %1075
      %1078 = vset.pattern.permute.xlu0 2
      %1079 = vperm.xlu0 %1078, %v524
      %v1080 = vpop.permute.xlu0 %1079
      %1082 = vset.pattern.permute.xlu0 2
      %1083 = vperm.xlu0 %1082, %v525
      %v1084 = vpop.permute.xlu0 %1083
      %1086 = vset.pattern.permute.xlu0 2
      %1087 = vperm.xlu0 %1086, %v526
      %v1088 = vpop.permute.xlu0 %1087
      %1090 = vset.pattern.permute.xlu0 2
      %1091 = vperm.xlu0 %1090, %v527
      %v1092 = vpop.permute.xlu0 %1091
      %1094 = vset.pattern.permute.xlu0 2
      %1095 = vperm.xlu0 %1094, %v528
      %v1096 = vpop.permute.xlu0 %1095
      %1098 = vset.pattern.permute.xlu0 2
      %1099 = vperm.xlu0 %1098, %v529
      %v1100 = vpop.permute.xlu0 %1099
      %1102 = vset.pattern.permute.xlu0 2
      %1103 = vperm.xlu0 %1102, %v530
      %v1104 = vpop.permute.xlu0 %1103
      %1106 = vset.pattern.permute.xlu0 2
      %1107 = vperm.xlu0 %1106, %v531
      %v1108 = vpop.permute.xlu0 %1107
      %1110 = vset.pattern.permute.xlu0 2
      %1111 = vperm.xlu0 %1110, %v532
      %v1112 = vpop.permute.xlu0 %1111
      %1114 = vset.pattern.permute.xlu0 2
      %1115 = vperm.xlu0 %1114, %v533
      %v1116 = vpop.permute.xlu0 %1115
      %1118 = vset.pattern.permute.xlu0 2
      %1119 = vperm.xlu0 %1118, %v534
      %v1120 = vpop.permute.xlu0 %1119
      %1122 = vset.pattern.permute.xlu0 2
      %1123 = vperm.xlu0 %1122, %v535
      %v1124 = vpop.permute.xlu0 %1123
      %1126 = vset.pattern.permute.xlu0 2
      %1127 = vperm.xlu0 %1126, %v536
      %v1128 = vpop.permute.xlu0 %1127
      %1130 = vset.pattern.permute.xlu0 2
      %1131 = vperm.xlu0 %1130, %v537
      %v1132 = vpop.permute.xlu0 %1131
      %1134 = vset.pattern.permute.xlu0 2
      %1135 = vperm.xlu0 %1134, %v538
      %v1136 = vpop.permute.xlu0 %1135
      %1138 = vset.pattern.permute.xlu0 2
      %1139 = vperm.xlu0 %1138, %v539
      %v1140 = vpop.permute.xlu0 %1139
      %1142 = vset.pattern.permute.xlu0 2
      %1143 = vperm.xlu0 %1142, %v540
      %v1144 = vpop.permute.xlu0 %1143
      %1146 = vset.pattern.permute.xlu0 2
      %1147 = vperm.xlu0 %1146, %v541
      %v1148 = vpop.permute.xlu0 %1147
      %1150 = vset.pattern.permute.xlu0 2
      %1151 = vperm.xlu0 %1150, %v542
      %v1152 = vpop.permute.xlu0 %1151
      %1154 = vset.pattern.permute.xlu0 2
      %1155 = vperm.xlu0 %1154, %v543
      %v1156 = vpop.permute.xlu0 %1155
      %1158 = vset.pattern.permute.xlu0 2
      %1159 = vperm.xlu0 %1158, %v544
      %v1160 = vpop.permute.xlu0 %1159
      %1162 = vset.pattern.permute.xlu0 2
      %1163 = vperm.xlu0 %1162, %v545
      %v1164 = vpop.permute.xlu0 %1163
      %v1166 = vlaneseq
      %v1167 = vshrl.u32 %v1166, 7
      %v1168 = vsub.s32 2, %v1167
      %v1169 = vrot.slane %v502, %v1168
      %v1170 = vmul.f32 %v1024, %v1169
      %v1171 = vmul.f32 %v1028, %v1169
      %v1172 = vmul.f32 %v1032, %v1169
      %v1173 = vmul.f32 %v1036, %v1169
      %v1174 = vmul.f32 %v1040, %v1169
      %v1175 = vmul.f32 %v1044, %v1169
      %v1176 = vmul.f32 %v1048, %v1169
      %v1177 = vmul.f32 %v1052, %v1169
      %v1178 = vmul.f32 %v1056, %v1169
      %v1179 = vmul.f32 %v1060, %v1169
      %v1180 = vmul.f32 %v1064, %v1169
      %v1181 = vmul.f32 %v1068, %v1169
      %v1182 = vmul.f32 %v1072, %v1169
      %v1183 = vmul.f32 %v1076, %v1169
      %v1184 = vmul.f32 %v1080, %v1169
      %v1185 = vmul.f32 %v1084, %v1169
      %v1186 = vmul.f32 %v1088, %v1169
      %v1187 = vmul.f32 %v1092, %v1169
      %v1188 = vmul.f32 %v1096, %v1169
      %v1189 = vmul.f32 %v1100, %v1169
      %v1190 = vmul.f32 %v1104, %v1169
      %v1191 = vmul.f32 %v1108, %v1169
      %v1192 = vmul.f32 %v1112, %v1169
      %v1193 = vmul.f32 %v1116, %v1169
      %v1194 = vmul.f32 %v1120, %v1169
      %v1195 = vmul.f32 %v1124, %v1169
      %v1196 = vmul.f32 %v1128, %v1169
      %v1197 = vmul.f32 %v1132, %v1169
      %v1198 = vmul.f32 %v1136, %v1169
      %v1199 = vmul.f32 %v1140, %v1169
      %v1200 = vmul.f32 %v1144, %v1169
      %v1201 = vmul.f32 %v1148, %v1169
      %v1202 = vmul.f32 %v1152, %v1169
      %v1203 = vmul.f32 %v1156, %v1169
      %v1204 = vmul.f32 %v1160, %v1169
      %v1205 = vmul.f32 %v1164, %v1169
      %v1206 = vadd.f32 %v986, %v1170
      %v1207 = vadd.f32 %v987, %v1171
      %v1208 = vadd.f32 %v988, %v1172
      %v1209 = vadd.f32 %v989, %v1173
      %v1210 = vadd.f32 %v990, %v1174
      %v1211 = vadd.f32 %v991, %v1175
      %v1212 = vadd.f32 %v992, %v1176
      %v1213 = vadd.f32 %v993, %v1177
      %v1214 = vadd.f32 %v994, %v1178
      %v1215 = vadd.f32 %v995, %v1179
      %v1216 = vadd.f32 %v996, %v1180
      %v1217 = vadd.f32 %v997, %v1181
      %v1218 = vadd.f32 %v998, %v1182
      %v1219 = vadd.f32 %v999, %v1183
      %v1220 = vadd.f32 %v1000, %v1184
      %v1221 = vadd.f32 %v1001, %v1185
      %v1222 = vadd.f32 %v1002, %v1186
      %v1223 = vadd.f32 %v1003, %v1187
      %v1224 = vadd.f32 %v1004, %v1188
      %v1225 = vadd.f32 %v1005, %v1189
      %v1226 = vadd.f32 %v1006, %v1190
      %v1227 = vadd.f32 %v1007, %v1191
      %v1228 = vadd.f32 %v1008, %v1192
      %v1229 = vadd.f32 %v1009, %v1193
      %v1230 = vadd.f32 %v1010, %v1194
      %v1231 = vadd.f32 %v1011, %v1195
      %v1232 = vadd.f32 %v1012, %v1196
      %v1233 = vadd.f32 %v1013, %v1197
      %v1234 = vadd.f32 %v1014, %v1198
      %v1235 = vadd.f32 %v1015, %v1199
      %v1236 = vadd.f32 %v1016, %v1200
      %v1237 = vadd.f32 %v1017, %v1201
      %v1238 = vadd.f32 %v1018, %v1202
      %v1239 = vadd.f32 %v1019, %v1203
      %v1240 = vadd.f32 %v1020, %v1204
      %v1241 = vadd.f32 %v1021, %v1205
      %1242 = vset.pattern.permute.xlu0 3
      %1243 = vperm.xlu0 %1242, %v510
      %v1244 = vpop.permute.xlu0 %1243
      %1246 = vset.pattern.permute.xlu0 3
      %1247 = vperm.xlu0 %1246, %v511
      %v1248 = vpop.permute.xlu0 %1247
      %1250 = vset.pattern.permute.xlu0 3
      %1251 = vperm.xlu0 %1250, %v512
      %v1252 = vpop.permute.xlu0 %1251
      %1254 = vset.pattern.permute.xlu0 3
      %1255 = vperm.xlu0 %1254, %v513
      %v1256 = vpop.permute.xlu0 %1255
      %1258 = vset.pattern.permute.xlu0 3
      %1259 = vperm.xlu0 %1258, %v514
      %v1260 = vpop.permute.xlu0 %1259
      %1262 = vset.pattern.permute.xlu0 3
      %1263 = vperm.xlu0 %1262, %v515
      %v1264 = vpop.permute.xlu0 %1263
      %1266 = vset.pattern.permute.xlu0 3
      %1267 = vperm.xlu0 %1266, %v516
      %v1268 = vpop.permute.xlu0 %1267
      %1270 = vset.pattern.permute.xlu0 3
      %1271 = vperm.xlu0 %1270, %v517
      %v1272 = vpop.permute.xlu0 %1271
      %1274 = vset.pattern.permute.xlu0 3
      %1275 = vperm.xlu0 %1274, %v518
      %v1276 = vpop.permute.xlu0 %1275
      %1278 = vset.pattern.permute.xlu0 3
      %1279 = vperm.xlu0 %1278, %v519
      %v1280 = vpop.permute.xlu0 %1279
      %1282 = vset.pattern.permute.xlu0 3
      %1283 = vperm.xlu0 %1282, %v520
      %v1284 = vpop.permute.xlu0 %1283
      %1286 = vset.pattern.permute.xlu0 3
      %1287 = vperm.xlu0 %1286, %v521
      %v1288 = vpop.permute.xlu0 %1287
      %1290 = vset.pattern.permute.xlu0 3
      %1291 = vperm.xlu0 %1290, %v522
      %v1292 = vpop.permute.xlu0 %1291
      %1294 = vset.pattern.permute.xlu0 3
      %1295 = vperm.xlu0 %1294, %v523
      %v1296 = vpop.permute.xlu0 %1295
      %1298 = vset.pattern.permute.xlu0 3
      %1299 = vperm.xlu0 %1298, %v524
      %v1300 = vpop.permute.xlu0 %1299
      %1302 = vset.pattern.permute.xlu0 3
      %1303 = vperm.xlu0 %1302, %v525
      %v1304 = vpop.permute.xlu0 %1303
      %1306 = vset.pattern.permute.xlu0 3
      %1307 = vperm.xlu0 %1306, %v526
      %v1308 = vpop.permute.xlu0 %1307
      %1310 = vset.pattern.permute.xlu0 3
      %1311 = vperm.xlu0 %1310, %v527
      %v1312 = vpop.permute.xlu0 %1311
      %1314 = vset.pattern.permute.xlu0 3
      %1315 = vperm.xlu0 %1314, %v528
      %v1316 = vpop.permute.xlu0 %1315
      %1318 = vset.pattern.permute.xlu0 3
      %1319 = vperm.xlu0 %1318, %v529
      %v1320 = vpop.permute.xlu0 %1319
      %1322 = vset.pattern.permute.xlu0 3
      %1323 = vperm.xlu0 %1322, %v530
      %v1324 = vpop.permute.xlu0 %1323
      %1326 = vset.pattern.permute.xlu0 3
      %1327 = vperm.xlu0 %1326, %v531
      %v1328 = vpop.permute.xlu0 %1327
      %1330 = vset.pattern.permute.xlu0 3
      %1331 = vperm.xlu0 %1330, %v532
      %v1332 = vpop.permute.xlu0 %1331
      %1334 = vset.pattern.permute.xlu0 3
      %1335 = vperm.xlu0 %1334, %v533
      %v1336 = vpop.permute.xlu0 %1335
      %1338 = vset.pattern.permute.xlu0 3
      %1339 = vperm.xlu0 %1338, %v534
      %v1340 = vpop.permute.xlu0 %1339
      %1342 = vset.pattern.permute.xlu0 3
      %1343 = vperm.xlu0 %1342, %v535
      %v1344 = vpop.permute.xlu0 %1343
      %1346 = vset.pattern.permute.xlu0 3
      %1347 = vperm.xlu0 %1346, %v536
      %v1348 = vpop.permute.xlu0 %1347
      %1350 = vset.pattern.permute.xlu0 3
      %1351 = vperm.xlu0 %1350, %v537
      %v1352 = vpop.permute.xlu0 %1351
      %1354 = vset.pattern.permute.xlu0 3
      %1355 = vperm.xlu0 %1354, %v538
      %v1356 = vpop.permute.xlu0 %1355
      %1358 = vset.pattern.permute.xlu0 3
      %1359 = vperm.xlu0 %1358, %v539
      %v1360 = vpop.permute.xlu0 %1359
      %1362 = vset.pattern.permute.xlu0 3
      %1363 = vperm.xlu0 %1362, %v540
      %v1364 = vpop.permute.xlu0 %1363
      %1366 = vset.pattern.permute.xlu0 3
      %1367 = vperm.xlu0 %1366, %v541
      %v1368 = vpop.permute.xlu0 %1367
      %1370 = vset.pattern.permute.xlu0 3
      %1371 = vperm.xlu0 %1370, %v542
      %v1372 = vpop.permute.xlu0 %1371
      %1374 = vset.pattern.permute.xlu0 3
      %1375 = vperm.xlu0 %1374, %v543
      %v1376 = vpop.permute.xlu0 %1375
      %1378 = vset.pattern.permute.xlu0 3
      %1379 = vperm.xlu0 %1378, %v544
      %v1380 = vpop.permute.xlu0 %1379
      %1382 = vset.pattern.permute.xlu0 3
      %1383 = vperm.xlu0 %1382, %v545
      %v1384 = vpop.permute.xlu0 %1383
      %v1386 = vlaneseq
      %v1387 = vshrl.u32 %v1386, 7
      %v1388 = vsub.s32 3, %v1387
      %v1389 = vrot.slane %v502, %v1388
      %v1390 = vmul.f32 %v1244, %v1389
      %v1391 = vmul.f32 %v1248, %v1389
      %v1392 = vmul.f32 %v1252, %v1389
      %v1393 = vmul.f32 %v1256, %v1389
      %v1394 = vmul.f32 %v1260, %v1389
      %v1395 = vmul.f32 %v1264, %v1389
      %v1396 = vmul.f32 %v1268, %v1389
      %v1397 = vmul.f32 %v1272, %v1389
      %v1398 = vmul.f32 %v1276, %v1389
      %v1399 = vmul.f32 %v1280, %v1389
      %v1400 = vmul.f32 %v1284, %v1389
      %v1401 = vmul.f32 %v1288, %v1389
      %v1402 = vmul.f32 %v1292, %v1389
      %v1403 = vmul.f32 %v1296, %v1389
      %v1404 = vmul.f32 %v1300, %v1389
      %v1405 = vmul.f32 %v1304, %v1389
      %v1406 = vmul.f32 %v1308, %v1389
      %v1407 = vmul.f32 %v1312, %v1389
      %v1408 = vmul.f32 %v1316, %v1389
      %v1409 = vmul.f32 %v1320, %v1389
      %v1410 = vmul.f32 %v1324, %v1389
      %v1411 = vmul.f32 %v1328, %v1389
      %v1412 = vmul.f32 %v1332, %v1389
      %v1413 = vmul.f32 %v1336, %v1389
      %v1414 = vmul.f32 %v1340, %v1389
      %v1415 = vmul.f32 %v1344, %v1389
      %v1416 = vmul.f32 %v1348, %v1389
      %v1417 = vmul.f32 %v1352, %v1389
      %v1418 = vmul.f32 %v1356, %v1389
      %v1419 = vmul.f32 %v1360, %v1389
      %v1420 = vmul.f32 %v1364, %v1389
      %v1421 = vmul.f32 %v1368, %v1389
      %v1422 = vmul.f32 %v1372, %v1389
      %v1423 = vmul.f32 %v1376, %v1389
      %v1424 = vmul.f32 %v1380, %v1389
      %v1425 = vmul.f32 %v1384, %v1389
      %v1426 = vadd.f32 %v1206, %v1390
      %v1427 = vadd.f32 %v1207, %v1391
      %v1428 = vadd.f32 %v1208, %v1392
      %v1429 = vadd.f32 %v1209, %v1393
      %v1430 = vadd.f32 %v1210, %v1394
      %v1431 = vadd.f32 %v1211, %v1395
      %v1432 = vadd.f32 %v1212, %v1396
      %v1433 = vadd.f32 %v1213, %v1397
      %v1434 = vadd.f32 %v1214, %v1398
      %v1435 = vadd.f32 %v1215, %v1399
      %v1436 = vadd.f32 %v1216, %v1400
      %v1437 = vadd.f32 %v1217, %v1401
      %v1438 = vadd.f32 %v1218, %v1402
      %v1439 = vadd.f32 %v1219, %v1403
      %v1440 = vadd.f32 %v1220, %v1404
      %v1441 = vadd.f32 %v1221, %v1405
      %v1442 = vadd.f32 %v1222, %v1406
      %v1443 = vadd.f32 %v1223, %v1407
      %v1444 = vadd.f32 %v1224, %v1408
      %v1445 = vadd.f32 %v1225, %v1409
      %v1446 = vadd.f32 %v1226, %v1410
      %v1447 = vadd.f32 %v1227, %v1411
      %v1448 = vadd.f32 %v1228, %v1412
      %v1449 = vadd.f32 %v1229, %v1413
      %v1450 = vadd.f32 %v1230, %v1414
      %v1451 = vadd.f32 %v1231, %v1415
      %v1452 = vadd.f32 %v1232, %v1416
      %v1453 = vadd.f32 %v1233, %v1417
      %v1454 = vadd.f32 %v1234, %v1418
      %v1455 = vadd.f32 %v1235, %v1419
      %v1456 = vadd.f32 %v1236, %v1420
      %v1457 = vadd.f32 %v1237, %v1421
      %v1458 = vadd.f32 %v1238, %v1422
      %v1459 = vadd.f32 %v1239, %v1423
      %v1460 = vadd.f32 %v1240, %v1424
      %v1461 = vadd.f32 %v1241, %v1425
      %v1463 = vlaneseq
      %v1464 = vshrl.u32 %v1463, 7
      %v1465 = vsub.s32 0, %v1464
      %v1466 = vrot.slane %v503, %v1465
      %v1468 = vmul.f32 %v1426, %v1466
      %v1469 = vmul.f32 %v1427, %v1466
      %v1470 = vmul.f32 %v1428, %v1466
      %v1471 = vmul.f32 %v1429, %v1466
      %v1472 = vmul.f32 %v1430, %v1466
      %v1473 = vmul.f32 %v1431, %v1466
      %v1474 = vmul.f32 %v1432, %v1466
      %v1475 = vmul.f32 %v1433, %v1466
      %v1476 = vmul.f32 %v1434, %v1466
      %v1477 = vmul.f32 %v1435, %v1466
      %v1478 = vmul.f32 %v1436, %v1466
      %v1479 = vmul.f32 %v1437, %v1466
      %v1480 = vmul.f32 %v1438, %v1466
      %v1481 = vmul.f32 %v1439, %v1466
      %v1482 = vmul.f32 %v1440, %v1466
      %v1483 = vmul.f32 %v1441, %v1466
      %v1484 = vmul.f32 %v1442, %v1466
      %v1485 = vmul.f32 %v1443, %v1466
      %v1486 = vmul.f32 %v1444, %v1466
      %v1487 = vmul.f32 %v1445, %v1466
      %v1488 = vmul.f32 %v1446, %v1466
      %v1489 = vmul.f32 %v1447, %v1466
      %v1490 = vmul.f32 %v1448, %v1466
      %v1491 = vmul.f32 %v1449, %v1466
      %v1492 = vmul.f32 %v1450, %v1466
      %v1493 = vmul.f32 %v1451, %v1466
      %v1494 = vmul.f32 %v1452, %v1466
      %v1495 = vmul.f32 %v1453, %v1466
      %v1496 = vmul.f32 %v1454, %v1466
      %v1497 = vmul.f32 %v1455, %v1466
      %v1498 = vmul.f32 %v1456, %v1466
      %v1499 = vmul.f32 %v1457, %v1466
      %v1500 = vmul.f32 %v1458, %v1466
      %v1501 = vmul.f32 %v1459, %v1466
      %v1502 = vmul.f32 %v1460, %v1466
      %v1503 = vmul.f32 %v1461, %v1466
      %v1505 = vlaneseq
      %v1506 = vshrl.u32 %v1505, 7
      %v1507 = vsub.s32 0, %v1506
      %v1508 = vrot.slane %v504, %v1507
      %v1510 = vadd.f32 %v1468, %v1508
      %v1511 = vadd.f32 %v1469, %v1508
      %v1512 = vadd.f32 %v1470, %v1508
      %v1513 = vadd.f32 %v1471, %v1508
      %v1514 = vadd.f32 %v1472, %v1508
      %v1515 = vadd.f32 %v1473, %v1508
      %v1516 = vadd.f32 %v1474, %v1508
      %v1517 = vadd.f32 %v1475, %v1508
      %v1518 = vadd.f32 %v1476, %v1508
      %v1519 = vadd.f32 %v1477, %v1508
      %v1520 = vadd.f32 %v1478, %v1508
      %v1521 = vadd.f32 %v1479, %v1508
      %v1522 = vadd.f32 %v1480, %v1508
      %v1523 = vadd.f32 %v1481, %v1508
      %v1524 = vadd.f32 %v1482, %v1508
      %v1525 = vadd.f32 %v1483, %v1508
      %v1526 = vadd.f32 %v1484, %v1508
      %v1527 = vadd.f32 %v1485, %v1508
      %v1528 = vadd.f32 %v1486, %v1508
      %v1529 = vadd.f32 %v1487, %v1508
      %v1530 = vadd.f32 %v1488, %v1508
      %v1531 = vadd.f32 %v1489, %v1508
      %v1532 = vadd.f32 %v1490, %v1508
      %v1533 = vadd.f32 %v1491, %v1508
      %v1534 = vadd.f32 %v1492, %v1508
      %v1535 = vadd.f32 %v1493, %v1508
      %v1536 = vadd.f32 %v1494, %v1508
      %v1537 = vadd.f32 %v1495, %v1508
      %v1538 = vadd.f32 %v1496, %v1508
      %v1539 = vadd.f32 %v1497, %v1508
      %v1540 = vadd.f32 %v1498, %v1508
      %v1541 = vadd.f32 %v1499, %v1508
      %v1542 = vadd.f32 %v1500, %v1508
      %v1543 = vadd.f32 %v1501, %v1508
      %v1544 = vadd.f32 %v1502, %v1508
      %v1545 = vadd.f32 %v1503, %v1508
      %v1546 = vmax.f32 %v1510, 0.0
      %v1547 = vmax.f32 %v1511, 0.0
      %v1548 = vmax.f32 %v1512, 0.0
      %v1549 = vmax.f32 %v1513, 0.0
      %v1550 = vmax.f32 %v1514, 0.0
      %v1551 = vmax.f32 %v1515, 0.0
      %v1552 = vmax.f32 %v1516, 0.0
      %v1553 = vmax.f32 %v1517, 0.0
      %v1554 = vmax.f32 %v1518, 0.0
      %v1555 = vmax.f32 %v1519, 0.0
      %v1556 = vmax.f32 %v1520, 0.0
      %v1557 = vmax.f32 %v1521, 0.0
      %v1558 = vmax.f32 %v1522, 0.0
      %v1559 = vmax.f32 %v1523, 0.0
      %v1560 = vmax.f32 %v1524, 0.0
      %v1561 = vmax.f32 %v1525, 0.0
      %v1562 = vmax.f32 %v1526, 0.0
      %v1563 = vmax.f32 %v1527, 0.0
      %v1564 = vmax.f32 %v1528, 0.0
      %v1565 = vmax.f32 %v1529, 0.0
      %v1566 = vmax.f32 %v1530, 0.0
      %v1567 = vmax.f32 %v1531, 0.0
      %v1568 = vmax.f32 %v1532, 0.0
      %v1569 = vmax.f32 %v1533, 0.0
      %v1570 = vmax.f32 %v1534, 0.0
      %v1571 = vmax.f32 %v1535, 0.0
      %v1572 = vmax.f32 %v1536, 0.0
      %v1573 = vmax.f32 %v1537, 0.0
      %v1574 = vmax.f32 %v1538, 0.0
      %v1575 = vmax.f32 %v1539, 0.0
      %v1576 = vmax.f32 %v1540, 0.0
      %v1577 = vmax.f32 %v1541, 0.0
      %v1578 = vmax.f32 %v1542, 0.0
      %v1579 = vmax.f32 %v1543, 0.0
      %v1580 = vmax.f32 %v1544, 0.0
      %v1581 = vmax.f32 %v1545, 0.0
      %s1582 = ssub.s32 %s501, 1
      %v1583 = vstv %s1582
      %v1584 = vadd.s32 %v1583, 1
      %v1585 = vadd.s32 %v1583, 2
      %v1586 = vadd.s32 %v1583, 3
      %v1587 = vadd.s32 %v1583, 4
      %v1588 = vadd.s32 %v1583, 5
      %v1589 = vadd.s32 %v1583, 6
      %v1590 = vadd.s32 %v1583, 7
      %v1591 = vadd.s32 %v1583, 8
      %v1592 = vadd.s32 %v1583, 9
      %v1593 = vadd.s32 %v1583, 10
      %v1594 = vadd.s32 %v1583, 11
      %v1595 = vadd.s32 %v1583, 12
      %v1596 = vadd.s32 %v1583, 13
      %v1597 = vadd.s32 %v1583, 14
      %v1598 = vadd.s32 %v1583, 15
      %v1599 = vadd.s32 %v1583, 16
      %v1600 = vadd.s32 %v1583, 17
      %vm1601 = vcmp.ge.s32.totalorder %v1583, 0
      %vm1602 = vcmp.ge.s32.totalorder %v1584, 0
      %vm1603 = vcmp.ge.s32.totalorder %v1585, 0
      %vm1604 = vcmp.ge.s32.totalorder %v1586, 0
      %vm1605 = vcmp.ge.s32.totalorder %v1587, 0
      %vm1606 = vcmp.ge.s32.totalorder %v1588, 0
      %vm1607 = vcmp.ge.s32.totalorder %v1589, 0
      %vm1608 = vcmp.ge.s32.totalorder %v1590, 0
      %vm1609 = vcmp.ge.s32.totalorder %v1591, 0
      %vm1610 = vcmp.ge.s32.totalorder %v1592, 0
      %vm1611 = vcmp.ge.s32.totalorder %v1593, 0
      %vm1612 = vcmp.ge.s32.totalorder %v1594, 0
      %vm1613 = vcmp.ge.s32.totalorder %v1595, 0
      %vm1614 = vcmp.ge.s32.totalorder %v1596, 0
      %vm1615 = vcmp.ge.s32.totalorder %v1597, 0
      %vm1616 = vcmp.ge.s32.totalorder %v1598, 0
      %vm1617 = vcmp.ge.s32.totalorder %v1599, 0
      %vm1618 = vcmp.ge.s32.totalorder %v1600, 0
      %vm1619 = vcmp.lt.s32.totalorder %v1583, 16
      %vm1620 = vcmp.lt.s32.totalorder %v1584, 16
      %vm1621 = vcmp.lt.s32.totalorder %v1585, 16
      %vm1622 = vcmp.lt.s32.totalorder %v1586, 16
      %vm1623 = vcmp.lt.s32.totalorder %v1587, 16
      %vm1624 = vcmp.lt.s32.totalorder %v1588, 16
      %vm1625 = vcmp.lt.s32.totalorder %v1589, 16
      %vm1626 = vcmp.lt.s32.totalorder %v1590, 16
      %vm1627 = vcmp.lt.s32.totalorder %v1591, 16
      %vm1628 = vcmp.lt.s32.totalorder %v1592, 16
      %vm1629 = vcmp.lt.s32.totalorder %v1593, 16
      %vm1630 = vcmp.lt.s32.totalorder %v1594, 16
      %vm1631 = vcmp.lt.s32.totalorder %v1595, 16
      %vm1632 = vcmp.lt.s32.totalorder %v1596, 16
      %vm1633 = vcmp.lt.s32.totalorder %v1597, 16
      %vm1634 = vcmp.lt.s32.totalorder %v1598, 16
      %vm1635 = vcmp.lt.s32.totalorder %v1599, 16
      %vm1636 = vcmp.lt.s32.totalorder %v1600, 16
      %vm1637 = vmand %vm1601, %vm1619
      %vm1638 = vmand %vm1602, %vm1620
      %vm1639 = vmand %vm1603, %vm1621
      %vm1640 = vmand %vm1604, %vm1622
      %vm1641 = vmand %vm1605, %vm1623
      %vm1642 = vmand %vm1606, %vm1624
      %vm1643 = vmand %vm1607, %vm1625
      %vm1644 = vmand %vm1608, %vm1626
      %vm1645 = vmand %vm1609, %vm1627
      %vm1646 = vmand %vm1610, %vm1628
      %vm1647 = vmand %vm1611, %vm1629
      %vm1648 = vmand %vm1612, %vm1630
      %vm1649 = vmand %vm1613, %vm1631
      %vm1650 = vmand %vm1614, %vm1632
      %vm1651 = vmand %vm1615, %vm1633
      %vm1652 = vmand %vm1616, %vm1634
      %vm1653 = vmand %vm1617, %vm1635
      %vm1654 = vmand %vm1618, %vm1636
      %v1655 = vsel %vm1637, 1, 0
      %v1656 = vsel %vm1638, 1, 0
      %v1657 = vsel %vm1639, 1, 0
      %v1658 = vsel %vm1640, 1, 0
      %v1659 = vsel %vm1641, 1, 0
      %v1660 = vsel %vm1642, 1, 0
      %v1661 = vsel %vm1643, 1, 0
      %v1662 = vsel %vm1644, 1, 0
      %v1663 = vsel %vm1645, 1, 0
      %v1664 = vsel %vm1646, 1, 0
      %v1665 = vsel %vm1647, 1, 0
      %v1666 = vsel %vm1648, 1, 0
      %v1667 = vsel %vm1649, 1, 0
      %v1668 = vsel %vm1650, 1, 0
      %v1669 = vsel %vm1651, 1, 0
      %v1670 = vsel %vm1652, 1, 0
      %v1671 = vsel %vm1653, 1, 0
      %v1672 = vsel %vm1654, 1, 0
      %vm1673 = vcmp.eq.s32.totalorder %v1655, 1
      %vm1674 = vcmp.eq.s32.totalorder %v1656, 1
      %vm1675 = vcmp.eq.s32.totalorder %v1657, 1
      %vm1676 = vcmp.eq.s32.totalorder %v1658, 1
      %vm1677 = vcmp.eq.s32.totalorder %v1659, 1
      %vm1678 = vcmp.eq.s32.totalorder %v1660, 1
      %vm1679 = vcmp.eq.s32.totalorder %v1661, 1
      %vm1680 = vcmp.eq.s32.totalorder %v1662, 1
      %vm1681 = vcmp.eq.s32.totalorder %v1663, 1
      %vm1682 = vcmp.eq.s32.totalorder %v1664, 1
      %vm1683 = vcmp.eq.s32.totalorder %v1665, 1
      %vm1684 = vcmp.eq.s32.totalorder %v1666, 1
      %vm1685 = vcmp.eq.s32.totalorder %v1667, 1
      %vm1686 = vcmp.eq.s32.totalorder %v1668, 1
      %vm1687 = vcmp.eq.s32.totalorder %v1669, 1
      %vm1688 = vcmp.eq.s32.totalorder %v1670, 1
      %vm1689 = vcmp.eq.s32.totalorder %v1671, 1
      %vm1690 = vcmp.eq.s32.totalorder %v1672, 1
      %v1691 = vsel %vm1673, %v1546, 0.0
      %v1692 = vsel %vm1673, %v1547, 0.0
      %v1693 = vsel %vm1674, %v1548, 0.0
      %v1694 = vsel %vm1674, %v1549, 0.0
      %v1695 = vsel %vm1675, %v1550, 0.0
      %v1696 = vsel %vm1675, %v1551, 0.0
      %v1697 = vsel %vm1676, %v1552, 0.0
      %v1698 = vsel %vm1676, %v1553, 0.0
      %v1699 = vsel %vm1677, %v1554, 0.0
      %v1700 = vsel %vm1677, %v1555, 0.0
      %v1701 = vsel %vm1678, %v1556, 0.0
      %v1702 = vsel %vm1678, %v1557, 0.0
      %v1703 = vsel %vm1679, %v1558, 0.0
      %v1704 = vsel %vm1679, %v1559, 0.0
      %v1705 = vsel %vm1680, %v1560, 0.0
      %v1706 = vsel %vm1680, %v1561, 0.0
      %v1707 = vsel %vm1681, %v1562, 0.0
      %v1708 = vsel %vm1681, %v1563, 0.0
      %v1709 = vsel %vm1682, %v1564, 0.0
      %v1710 = vsel %vm1682, %v1565, 0.0
      %v1711 = vsel %vm1683, %v1566, 0.0
      %v1712 = vsel %vm1683, %v1567, 0.0
      %v1713 = vsel %vm1684, %v1568, 0.0
      %v1714 = vsel %vm1684, %v1569, 0.0
      %v1715 = vsel %vm1685, %v1570, 0.0
      %v1716 = vsel %vm1685, %v1571, 0.0
      %v1717 = vsel %vm1686, %v1572, 0.0
      %v1718 = vsel %vm1686, %v1573, 0.0
      %v1719 = vsel %vm1687, %v1574, 0.0
      %v1720 = vsel %vm1687, %v1575, 0.0
      %v1721 = vsel %vm1688, %v1576, 0.0
      %v1722 = vsel %vm1688, %v1577, 0.0
      %v1723 = vsel %vm1689, %v1578, 0.0
      %v1724 = vsel %vm1689, %v1579, 0.0
      %v1725 = vsel %vm1690, %v1580, 0.0
      %v1726 = vsel %vm1690, %v1581, 0.0
      %vm1763 = vcmask 1040384
      %v1764 = vrot.slane %v1691, 7
      %v1765 = vrot.slane %v1692, 7
      %v1766 = vsel %vm1763, %v1764, %v1765
      %v1767 = vrot.slane %v1693, 7
      %v1768 = vrot.slane %v1694, 7
      %v1769 = vsel %vm1763, %v1767, %v1768
      %v1770 = vrot.slane %v1695, 7
      %v1771 = vrot.slane %v1696, 7
      %v1772 = vsel %vm1763, %v1770, %v1771
      %v1773 = vrot.slane %v1697, 7
      %v1774 = vrot.slane %v1698, 7
      %v1775 = vsel %vm1763, %v1773, %v1774
      %v1776 = vrot.slane %v1699, 7
      %v1777 = vrot.slane %v1700, 7
      %v1778 = vsel %vm1763, %v1776, %v1777
      %v1779 = vrot.slane %v1701, 7
      %v1780 = vrot.slane %v1702, 7
      %v1781 = vsel %vm1763, %v1779, %v1780
      %v1782 = vrot.slane %v1703, 7
      %v1783 = vrot.slane %v1704, 7
      %v1784 = vsel %vm1763, %v1782, %v1783
      %v1785 = vrot.slane %v1705, 7
      %v1786 = vrot.slane %v1706, 7
      %v1787 = vsel %vm1763, %v1785, %v1786
      %v1788 = vrot.slane %v1707, 7
      %v1789 = vrot.slane %v1708, 7
      %v1790 = vsel %vm1763, %v1788, %v1789
      %v1791 = vrot.slane %v1709, 7
      %v1792 = vrot.slane %v1710, 7
      %v1793 = vsel %vm1763, %v1791, %v1792
      %v1794 = vrot.slane %v1711, 7
      %v1795 = vrot.slane %v1712, 7
      %v1796 = vsel %vm1763, %v1794, %v1795
      %v1797 = vrot.slane %v1713, 7
      %v1798 = vrot.slane %v1714, 7
      %v1799 = vsel %vm1763, %v1797, %v1798
      %v1800 = vrot.slane %v1715, 7
      %v1801 = vrot.slane %v1716, 7
      %v1802 = vsel %vm1763, %v1800, %v1801
      %v1803 = vrot.slane %v1717, 7
      %v1804 = vrot.slane %v1718, 7
      %v1805 = vsel %vm1763, %v1803, %v1804
      %v1806 = vrot.slane %v1719, 7
      %v1807 = vrot.slane %v1720, 7
      %v1808 = vsel %vm1763, %v1806, %v1807
      %v1809 = vrot.slane %v1721, 7
      %v1810 = vrot.slane %v1722, 7
      %v1811 = vsel %vm1763, %v1809, %v1810
      %v1812 = vrot.slane %v1723, 7
      %v1813 = vrot.slane %v1724, 7
      %v1814 = vsel %vm1763, %v1812, %v1813
      %v1815 = vrot.slane %v1725, 7
      %v1816 = vrot.slane %v1726, 7
      %v1817 = vsel %vm1763, %v1815, %v1816
      %v1854 = vsel %vm1763, 0.0, %v1764
      %v1855 = vsel %vm1763, 0.0, %v1767
      %v1856 = vsel %vm1763, 0.0, %v1770
      %v1857 = vsel %vm1763, 0.0, %v1773
      %v1858 = vsel %vm1763, 0.0, %v1776
      %v1859 = vsel %vm1763, 0.0, %v1779
      %v1860 = vsel %vm1763, 0.0, %v1782
      %v1861 = vsel %vm1763, 0.0, %v1785
      %v1862 = vsel %vm1763, 0.0, %v1788
      %v1863 = vsel %vm1763, 0.0, %v1791
      %v1864 = vsel %vm1763, 0.0, %v1794
      %v1865 = vsel %vm1763, 0.0, %v1797
      %v1866 = vsel %vm1763, 0.0, %v1800
      %v1867 = vsel %vm1763, 0.0, %v1803
      %v1868 = vsel %vm1763, 0.0, %v1806
      %v1869 = vsel %vm1763, 0.0, %v1809
      %v1870 = vsel %vm1763, 0.0, %v1812
      %v1871 = vsel %vm1763, 0.0, %v1815
      %vm1872 = vcmask 1046528
      %v1873 = vrot.slane %v1691, 1
      %v1874 = vrot.slane %v1692, 1
      %v1875 = vsel %vm1872, %v1873, %v1874
      %v1876 = vrot.slane %v1693, 1
      %v1877 = vrot.slane %v1694, 1
      %v1878 = vsel %vm1872, %v1876, %v1877
      %v1879 = vrot.slane %v1695, 1
      %v1880 = vrot.slane %v1696, 1
      %v1881 = vsel %vm1872, %v1879, %v1880
      %v1882 = vrot.slane %v1697, 1
      %v1883 = vrot.slane %v1698, 1
      %v1884 = vsel %vm1872, %v1882, %v1883
      %v1885 = vrot.slane %v1699, 1
      %v1886 = vrot.slane %v1700, 1
      %v1887 = vsel %vm1872, %v1885, %v1886
      %v1888 = vrot.slane %v1701, 1
      %v1889 = vrot.slane %v1702, 1
      %v1890 = vsel %vm1872, %v1888, %v1889
      %v1891 = vrot.slane %v1703, 1
      %v1892 = vrot.slane %v1704, 1
      %v1893 = vsel %vm1872, %v1891, %v1892
      %v1894 = vrot.slane %v1705, 1
      %v1895 = vrot.slane %v1706, 1
      %v1896 = vsel %vm1872, %v1894, %v1895
      %v1897 = vrot.slane %v1707, 1
      %v1898 = vrot.slane %v1708, 1
      %v1899 = vsel %vm1872, %v1897, %v1898
      %v1900 = vrot.slane %v1709, 1
      %v1901 = vrot.slane %v1710, 1
      %v1902 = vsel %vm1872, %v1900, %v1901
      %v1903 = vrot.slane %v1711, 1
      %v1904 = vrot.slane %v1712, 1
      %v1905 = vsel %vm1872, %v1903, %v1904
      %v1906 = vrot.slane %v1713, 1
      %v1907 = vrot.slane %v1714, 1
      %v1908 = vsel %vm1872, %v1906, %v1907
      %v1909 = vrot.slane %v1715, 1
      %v1910 = vrot.slane %v1716, 1
      %v1911 = vsel %vm1872, %v1909, %v1910
      %v1912 = vrot.slane %v1717, 1
      %v1913 = vrot.slane %v1718, 1
      %v1914 = vsel %vm1872, %v1912, %v1913
      %v1915 = vrot.slane %v1719, 1
      %v1916 = vrot.slane %v1720, 1
      %v1917 = vsel %vm1872, %v1915, %v1916
      %v1918 = vrot.slane %v1721, 1
      %v1919 = vrot.slane %v1722, 1
      %v1920 = vsel %vm1872, %v1918, %v1919
      %v1921 = vrot.slane %v1723, 1
      %v1922 = vrot.slane %v1724, 1
      %v1923 = vsel %vm1872, %v1921, %v1922
      %v1924 = vrot.slane %v1725, 1
      %v1925 = vrot.slane %v1726, 1
      %v1926 = vsel %vm1872, %v1924, %v1925
      %v1963 = vsel %vm1872, %v1874, 0.0
      %v1964 = vsel %vm1872, %v1877, 0.0
      %v1965 = vsel %vm1872, %v1880, 0.0
      %v1966 = vsel %vm1872, %v1883, 0.0
      %v1967 = vsel %vm1872, %v1886, 0.0
      %v1968 = vsel %vm1872, %v1889, 0.0
      %v1969 = vsel %vm1872, %v1892, 0.0
      %v1970 = vsel %vm1872, %v1895, 0.0
      %v1971 = vsel %vm1872, %v1898, 0.0
      %v1972 = vsel %vm1872, %v1901, 0.0
      %v1973 = vsel %vm1872, %v1904, 0.0
      %v1974 = vsel %vm1872, %v1907, 0.0
      %v1975 = vsel %vm1872, %v1910, 0.0
      %v1976 = vsel %vm1872, %v1913, 0.0
      %v1977 = vsel %vm1872, %v1916, 0.0
      %v1978 = vsel %vm1872, %v1919, 0.0
      %v1979 = vsel %vm1872, %v1922, 0.0
      %v1980 = vsel %vm1872, %v1925, 0.0
      %v1981 = vlaneseq
      %v1982 = vshrl.u32 %v1981, 7
      %v1983 = vsub.s32 0, %v1982
      %v1984 = vrot.slane %v505, %v1983
      %v1985 = vmul.f32 %v1854, %v1984
      %v1986 = vmul.f32 %v1766, %v1984
      %v1987 = vmul.f32 %v1855, %v1984
      %v1988 = vmul.f32 %v1769, %v1984
      %v1989 = vmul.f32 %v1856, %v1984
      %v1990 = vmul.f32 %v1772, %v1984
      %v1991 = vmul.f32 %v1857, %v1984
      %v1992 = vmul.f32 %v1775, %v1984
      %v1993 = vmul.f32 %v1858, %v1984
      %v1994 = vmul.f32 %v1778, %v1984
      %v1995 = vmul.f32 %v1859, %v1984
      %v1996 = vmul.f32 %v1781, %v1984
      %v1997 = vmul.f32 %v1860, %v1984
      %v1998 = vmul.f32 %v1784, %v1984
      %v1999 = vmul.f32 %v1861, %v1984
      %v2000 = vmul.f32 %v1787, %v1984
      %v2001 = vmul.f32 %v1862, %v1984
      %v2002 = vmul.f32 %v1790, %v1984
      %v2003 = vmul.f32 %v1863, %v1984
      %v2004 = vmul.f32 %v1793, %v1984
      %v2005 = vmul.f32 %v1864, %v1984
      %v2006 = vmul.f32 %v1796, %v1984
      %v2007 = vmul.f32 %v1865, %v1984
      %v2008 = vmul.f32 %v1799, %v1984
      %v2009 = vmul.f32 %v1866, %v1984
      %v2010 = vmul.f32 %v1802, %v1984
      %v2011 = vmul.f32 %v1867, %v1984
      %v2012 = vmul.f32 %v1805, %v1984
      %v2013 = vmul.f32 %v1868, %v1984
      %v2014 = vmul.f32 %v1808, %v1984
      %v2015 = vmul.f32 %v1869, %v1984
      %v2016 = vmul.f32 %v1811, %v1984
      %v2017 = vadd.f32 %v1985, 0.0
      %v2018 = vadd.f32 %v1986, 0.0
      %v2019 = vadd.f32 %v1987, 0.0
      %v2020 = vadd.f32 %v1988, 0.0
      %v2021 = vadd.f32 %v1989, 0.0
      %v2022 = vadd.f32 %v1990, 0.0
      %v2023 = vadd.f32 %v1991, 0.0
      %v2024 = vadd.f32 %v1992, 0.0
      %v2025 = vadd.f32 %v1993, 0.0
      %v2026 = vadd.f32 %v1994, 0.0
      %v2027 = vadd.f32 %v1995, 0.0
      %v2028 = vadd.f32 %v1996, 0.0
      %v2029 = vadd.f32 %v1997, 0.0
      %v2030 = vadd.f32 %v1998, 0.0
      %v2031 = vadd.f32 %v1999, 0.0
      %v2032 = vadd.f32 %v2000, 0.0
      %v2033 = vadd.f32 %v2001, 0.0
      %v2034 = vadd.f32 %v2002, 0.0
      %v2035 = vadd.f32 %v2003, 0.0
      %v2036 = vadd.f32 %v2004, 0.0
      %v2037 = vadd.f32 %v2005, 0.0
      %v2038 = vadd.f32 %v2006, 0.0
      %v2039 = vadd.f32 %v2007, 0.0
      %v2040 = vadd.f32 %v2008, 0.0
      %v2041 = vadd.f32 %v2009, 0.0
      %v2042 = vadd.f32 %v2010, 0.0
      %v2043 = vadd.f32 %v2011, 0.0
      %v2044 = vadd.f32 %v2012, 0.0
      %v2045 = vadd.f32 %v2013, 0.0
      %v2046 = vadd.f32 %v2014, 0.0
      %v2047 = vadd.f32 %v2015, 0.0
      %v2048 = vadd.f32 %v2016, 0.0
      %v2049 = vlaneseq
      %v2050 = vshrl.u32 %v2049, 7
      %v2051 = vsub.s32 1, %v2050
      %v2052 = vrot.slane %v505, %v2051
      %v2053 = vmul.f32 %v1691, %v2052
      %v2054 = vmul.f32 %v1692, %v2052
      %v2055 = vmul.f32 %v1693, %v2052
      %v2056 = vmul.f32 %v1694, %v2052
      %v2057 = vmul.f32 %v1695, %v2052
      %v2058 = vmul.f32 %v1696, %v2052
      %v2059 = vmul.f32 %v1697, %v2052
      %v2060 = vmul.f32 %v1698, %v2052
      %v2061 = vmul.f32 %v1699, %v2052
      %v2062 = vmul.f32 %v1700, %v2052
      %v2063 = vmul.f32 %v1701, %v2052
      %v2064 = vmul.f32 %v1702, %v2052
      %v2065 = vmul.f32 %v1703, %v2052
      %v2066 = vmul.f32 %v1704, %v2052
      %v2067 = vmul.f32 %v1705, %v2052
      %v2068 = vmul.f32 %v1706, %v2052
      %v2069 = vmul.f32 %v1707, %v2052
      %v2070 = vmul.f32 %v1708, %v2052
      %v2071 = vmul.f32 %v1709, %v2052
      %v2072 = vmul.f32 %v1710, %v2052
      %v2073 = vmul.f32 %v1711, %v2052
      %v2074 = vmul.f32 %v1712, %v2052
      %v2075 = vmul.f32 %v1713, %v2052
      %v2076 = vmul.f32 %v1714, %v2052
      %v2077 = vmul.f32 %v1715, %v2052
      %v2078 = vmul.f32 %v1716, %v2052
      %v2079 = vmul.f32 %v1717, %v2052
      %v2080 = vmul.f32 %v1718, %v2052
      %v2081 = vmul.f32 %v1719, %v2052
      %v2082 = vmul.f32 %v1720, %v2052
      %v2083 = vmul.f32 %v1721, %v2052
      %v2084 = vmul.f32 %v1722, %v2052
      %v2085 = vadd.f32 %v2017, %v2053
      %v2086 = vadd.f32 %v2018, %v2054
      %v2087 = vadd.f32 %v2019, %v2055
      %v2088 = vadd.f32 %v2020, %v2056
      %v2089 = vadd.f32 %v2021, %v2057
      %v2090 = vadd.f32 %v2022, %v2058
      %v2091 = vadd.f32 %v2023, %v2059
      %v2092 = vadd.f32 %v2024, %v2060
      %v2093 = vadd.f32 %v2025, %v2061
      %v2094 = vadd.f32 %v2026, %v2062
      %v2095 = vadd.f32 %v2027, %v2063
      %v2096 = vadd.f32 %v2028, %v2064
      %v2097 = vadd.f32 %v2029, %v2065
      %v2098 = vadd.f32 %v2030, %v2066
      %v2099 = vadd.f32 %v2031, %v2067
      %v2100 = vadd.f32 %v2032, %v2068
      %v2101 = vadd.f32 %v2033, %v2069
      %v2102 = vadd.f32 %v2034, %v2070
      %v2103 = vadd.f32 %v2035, %v2071
      %v2104 = vadd.f32 %v2036, %v2072
      %v2105 = vadd.f32 %v2037, %v2073
      %v2106 = vadd.f32 %v2038, %v2074
      %v2107 = vadd.f32 %v2039, %v2075
      %v2108 = vadd.f32 %v2040, %v2076
      %v2109 = vadd.f32 %v2041, %v2077
      %v2110 = vadd.f32 %v2042, %v2078
      %v2111 = vadd.f32 %v2043, %v2079
      %v2112 = vadd.f32 %v2044, %v2080
      %v2113 = vadd.f32 %v2045, %v2081
      %v2114 = vadd.f32 %v2046, %v2082
      %v2115 = vadd.f32 %v2047, %v2083
      %v2116 = vadd.f32 %v2048, %v2084
      %v2117 = vlaneseq
      %v2118 = vshrl.u32 %v2117, 7
      %v2119 = vsub.s32 2, %v2118
      %v2120 = vrot.slane %v505, %v2119
      %v2121 = vmul.f32 %v1875, %v2120
      %v2122 = vmul.f32 %v1963, %v2120
      %v2123 = vmul.f32 %v1878, %v2120
      %v2124 = vmul.f32 %v1964, %v2120
      %v2125 = vmul.f32 %v1881, %v2120
      %v2126 = vmul.f32 %v1965, %v2120
      %v2127 = vmul.f32 %v1884, %v2120
      %v2128 = vmul.f32 %v1966, %v2120
      %v2129 = vmul.f32 %v1887, %v2120
      %v2130 = vmul.f32 %v1967, %v2120
      %v2131 = vmul.f32 %v1890, %v2120
      %v2132 = vmul.f32 %v1968, %v2120
      %v2133 = vmul.f32 %v1893, %v2120
      %v2134 = vmul.f32 %v1969, %v2120
      %v2135 = vmul.f32 %v1896, %v2120
      %v2136 = vmul.f32 %v1970, %v2120
      %v2137 = vmul.f32 %v1899, %v2120
      %v2138 = vmul.f32 %v1971, %v2120
      %v2139 = vmul.f32 %v1902, %v2120
      %v2140 = vmul.f32 %v1972, %v2120
      %v2141 = vmul.f32 %v1905, %v2120
      %v2142 = vmul.f32 %v1973, %v2120
      %v2143 = vmul.f32 %v1908, %v2120
      %v2144 = vmul.f32 %v1974, %v2120
      %v2145 = vmul.f32 %v1911, %v2120
      %v2146 = vmul.f32 %v1975, %v2120
      %v2147 = vmul.f32 %v1914, %v2120
      %v2148 = vmul.f32 %v1976, %v2120
      %v2149 = vmul.f32 %v1917, %v2120
      %v2150 = vmul.f32 %v1977, %v2120
      %v2151 = vmul.f32 %v1920, %v2120
      %v2152 = vmul.f32 %v1978, %v2120
      %v2153 = vadd.f32 %v2085, %v2121
      %v2154 = vadd.f32 %v2086, %v2122
      %v2155 = vadd.f32 %v2087, %v2123
      %v2156 = vadd.f32 %v2088, %v2124
      %v2157 = vadd.f32 %v2089, %v2125
      %v2158 = vadd.f32 %v2090, %v2126
      %v2159 = vadd.f32 %v2091, %v2127
      %v2160 = vadd.f32 %v2092, %v2128
      %v2161 = vadd.f32 %v2093, %v2129
      %v2162 = vadd.f32 %v2094, %v2130
      %v2163 = vadd.f32 %v2095, %v2131
      %v2164 = vadd.f32 %v2096, %v2132
      %v2165 = vadd.f32 %v2097, %v2133
      %v2166 = vadd.f32 %v2098, %v2134
      %v2167 = vadd.f32 %v2099, %v2135
      %v2168 = vadd.f32 %v2100, %v2136
      %v2169 = vadd.f32 %v2101, %v2137
      %v2170 = vadd.f32 %v2102, %v2138
      %v2171 = vadd.f32 %v2103, %v2139
      %v2172 = vadd.f32 %v2104, %v2140
      %v2173 = vadd.f32 %v2105, %v2141
      %v2174 = vadd.f32 %v2106, %v2142
      %v2175 = vadd.f32 %v2107, %v2143
      %v2176 = vadd.f32 %v2108, %v2144
      %v2177 = vadd.f32 %v2109, %v2145
      %v2178 = vadd.f32 %v2110, %v2146
      %v2179 = vadd.f32 %v2111, %v2147
      %v2180 = vadd.f32 %v2112, %v2148
      %v2181 = vadd.f32 %v2113, %v2149
      %v2182 = vadd.f32 %v2114, %v2150
      %v2183 = vadd.f32 %v2115, %v2151
      %v2184 = vadd.f32 %v2116, %v2152
      %v2185 = vlaneseq
      %v2186 = vshrl.u32 %v2185, 7
      %v2187 = vsub.s32 0, %v2186
      %v2188 = vrot.slane %v506, %v2187
      %v2189 = vmul.f32 %v1855, %v2188
      %v2190 = vmul.f32 %v1769, %v2188
      %v2191 = vmul.f32 %v1856, %v2188
      %v2192 = vmul.f32 %v1772, %v2188
      %v2193 = vmul.f32 %v1857, %v2188
      %v2194 = vmul.f32 %v1775, %v2188
      %v2195 = vmul.f32 %v1858, %v2188
      %v2196 = vmul.f32 %v1778, %v2188
      %v2197 = vmul.f32 %v1859, %v2188
      %v2198 = vmul.f32 %v1781, %v2188
      %v2199 = vmul.f32 %v1860, %v2188
      %v2200 = vmul.f32 %v1784, %v2188
      %v2201 = vmul.f32 %v1861, %v2188
      %v2202 = vmul.f32 %v1787, %v2188
      %v2203 = vmul.f32 %v1862, %v2188
      %v2204 = vmul.f32 %v1790, %v2188
      %v2205 = vmul.f32 %v1863, %v2188
      %v2206 = vmul.f32 %v1793, %v2188
      %v2207 = vmul.f32 %v1864, %v2188
      %v2208 = vmul.f32 %v1796, %v2188
      %v2209 = vmul.f32 %v1865, %v2188
      %v2210 = vmul.f32 %v1799, %v2188
      %v2211 = vmul.f32 %v1866, %v2188
      %v2212 = vmul.f32 %v1802, %v2188
      %v2213 = vmul.f32 %v1867, %v2188
      %v2214 = vmul.f32 %v1805, %v2188
      %v2215 = vmul.f32 %v1868, %v2188
      %v2216 = vmul.f32 %v1808, %v2188
      %v2217 = vmul.f32 %v1869, %v2188
      %v2218 = vmul.f32 %v1811, %v2188
      %v2219 = vmul.f32 %v1870, %v2188
      %v2220 = vmul.f32 %v1814, %v2188
      %v2221 = vadd.f32 %v2153, %v2189
      %v2222 = vadd.f32 %v2154, %v2190
      %v2223 = vadd.f32 %v2155, %v2191
      %v2224 = vadd.f32 %v2156, %v2192
      %v2225 = vadd.f32 %v2157, %v2193
      %v2226 = vadd.f32 %v2158, %v2194
      %v2227 = vadd.f32 %v2159, %v2195
      %v2228 = vadd.f32 %v2160, %v2196
      %v2229 = vadd.f32 %v2161, %v2197
      %v2230 = vadd.f32 %v2162, %v2198
      %v2231 = vadd.f32 %v2163, %v2199
      %v2232 = vadd.f32 %v2164, %v2200
      %v2233 = vadd.f32 %v2165, %v2201
      %v2234 = vadd.f32 %v2166, %v2202
      %v2235 = vadd.f32 %v2167, %v2203
      %v2236 = vadd.f32 %v2168, %v2204
      %v2237 = vadd.f32 %v2169, %v2205
      %v2238 = vadd.f32 %v2170, %v2206
      %v2239 = vadd.f32 %v2171, %v2207
      %v2240 = vadd.f32 %v2172, %v2208
      %v2241 = vadd.f32 %v2173, %v2209
      %v2242 = vadd.f32 %v2174, %v2210
      %v2243 = vadd.f32 %v2175, %v2211
      %v2244 = vadd.f32 %v2176, %v2212
      %v2245 = vadd.f32 %v2177, %v2213
      %v2246 = vadd.f32 %v2178, %v2214
      %v2247 = vadd.f32 %v2179, %v2215
      %v2248 = vadd.f32 %v2180, %v2216
      %v2249 = vadd.f32 %v2181, %v2217
      %v2250 = vadd.f32 %v2182, %v2218
      %v2251 = vadd.f32 %v2183, %v2219
      %v2252 = vadd.f32 %v2184, %v2220
      %v2253 = vlaneseq
      %v2254 = vshrl.u32 %v2253, 7
      %v2255 = vsub.s32 1, %v2254
      %v2256 = vrot.slane %v506, %v2255
      %v2257 = vmul.f32 %v1693, %v2256
      %v2258 = vmul.f32 %v1694, %v2256
      %v2259 = vmul.f32 %v1695, %v2256
      %v2260 = vmul.f32 %v1696, %v2256
      %v2261 = vmul.f32 %v1697, %v2256
      %v2262 = vmul.f32 %v1698, %v2256
      %v2263 = vmul.f32 %v1699, %v2256
      %v2264 = vmul.f32 %v1700, %v2256
      %v2265 = vmul.f32 %v1701, %v2256
      %v2266 = vmul.f32 %v1702, %v2256
      %v2267 = vmul.f32 %v1703, %v2256
      %v2268 = vmul.f32 %v1704, %v2256
      %v2269 = vmul.f32 %v1705, %v2256
      %v2270 = vmul.f32 %v1706, %v2256
      %v2271 = vmul.f32 %v1707, %v2256
      %v2272 = vmul.f32 %v1708, %v2256
      %v2273 = vmul.f32 %v1709, %v2256
      %v2274 = vmul.f32 %v1710, %v2256
      %v2275 = vmul.f32 %v1711, %v2256
      %v2276 = vmul.f32 %v1712, %v2256
      %v2277 = vmul.f32 %v1713, %v2256
      %v2278 = vmul.f32 %v1714, %v2256
      %v2279 = vmul.f32 %v1715, %v2256
      %v2280 = vmul.f32 %v1716, %v2256
      %v2281 = vmul.f32 %v1717, %v2256
      %v2282 = vmul.f32 %v1718, %v2256
      %v2283 = vmul.f32 %v1719, %v2256
      %v2284 = vmul.f32 %v1720, %v2256
      %v2285 = vmul.f32 %v1721, %v2256
      %v2286 = vmul.f32 %v1722, %v2256
      %v2287 = vmul.f32 %v1723, %v2256
      %v2288 = vmul.f32 %v1724, %v2256
      %v2289 = vadd.f32 %v2221, %v2257
      %v2290 = vadd.f32 %v2222, %v2258
      %v2291 = vadd.f32 %v2223, %v2259
      %v2292 = vadd.f32 %v2224, %v2260
      %v2293 = vadd.f32 %v2225, %v2261
      %v2294 = vadd.f32 %v2226, %v2262
      %v2295 = vadd.f32 %v2227, %v2263
      %v2296 = vadd.f32 %v2228, %v2264
      %v2297 = vadd.f32 %v2229, %v2265
      %v2298 = vadd.f32 %v2230, %v2266
      %v2299 = vadd.f32 %v2231, %v2267
      %v2300 = vadd.f32 %v2232, %v2268
      %v2301 = vadd.f32 %v2233, %v2269
      %v2302 = vadd.f32 %v2234, %v2270
      %v2303 = vadd.f32 %v2235, %v2271
      %v2304 = vadd.f32 %v2236, %v2272
      %v2305 = vadd.f32 %v2237, %v2273
      %v2306 = vadd.f32 %v2238, %v2274
      %v2307 = vadd.f32 %v2239, %v2275
      %v2308 = vadd.f32 %v2240, %v2276
      %v2309 = vadd.f32 %v2241, %v2277
      %v2310 = vadd.f32 %v2242, %v2278
      %v2311 = vadd.f32 %v2243, %v2279
      %v2312 = vadd.f32 %v2244, %v2280
      %v2313 = vadd.f32 %v2245, %v2281
      %v2314 = vadd.f32 %v2246, %v2282
      %v2315 = vadd.f32 %v2247, %v2283
      %v2316 = vadd.f32 %v2248, %v2284
      %v2317 = vadd.f32 %v2249, %v2285
      %v2318 = vadd.f32 %v2250, %v2286
      %v2319 = vadd.f32 %v2251, %v2287
      %v2320 = vadd.f32 %v2252, %v2288
      %v2321 = vlaneseq
      %v2322 = vshrl.u32 %v2321, 7
      %v2323 = vsub.s32 2, %v2322
      %v2324 = vrot.slane %v506, %v2323
      %v2325 = vmul.f32 %v1878, %v2324
      %v2326 = vmul.f32 %v1964, %v2324
      %v2327 = vmul.f32 %v1881, %v2324
      %v2328 = vmul.f32 %v1965, %v2324
      %v2329 = vmul.f32 %v1884, %v2324
      %v2330 = vmul.f32 %v1966, %v2324
      %v2331 = vmul.f32 %v1887, %v2324
      %v2332 = vmul.f32 %v1967, %v2324
      %v2333 = vmul.f32 %v1890, %v2324
      %v2334 = vmul.f32 %v1968, %v2324
      %v2335 = vmul.f32 %v1893, %v2324
      %v2336 = vmul.f32 %v1969, %v2324
      %v2337 = vmul.f32 %v1896, %v2324
      %v2338 = vmul.f32 %v1970, %v2324
      %v2339 = vmul.f32 %v1899, %v2324
      %v2340 = vmul.f32 %v1971, %v2324
      %v2341 = vmul.f32 %v1902, %v2324
      %v2342 = vmul.f32 %v1972, %v2324
      %v2343 = vmul.f32 %v1905, %v2324
      %v2344 = vmul.f32 %v1973, %v2324
      %v2345 = vmul.f32 %v1908, %v2324
      %v2346 = vmul.f32 %v1974, %v2324
      %v2347 = vmul.f32 %v1911, %v2324
      %v2348 = vmul.f32 %v1975, %v2324
      %v2349 = vmul.f32 %v1914, %v2324
      %v2350 = vmul.f32 %v1976, %v2324
      %v2351 = vmul.f32 %v1917, %v2324
      %v2352 = vmul.f32 %v1977, %v2324
      %v2353 = vmul.f32 %v1920, %v2324
      %v2354 = vmul.f32 %v1978, %v2324
      %v2355 = vmul.f32 %v1923, %v2324
      %v2356 = vmul.f32 %v1979, %v2324
      %v2357 = vadd.f32 %v2289, %v2325
      %v2358 = vadd.f32 %v2290, %v2326
      %v2359 = vadd.f32 %v2291, %v2327
      %v2360 = vadd.f32 %v2292, %v2328
      %v2361 = vadd.f32 %v2293, %v2329
      %v2362 = vadd.f32 %v2294, %v2330
      %v2363 = vadd.f32 %v2295, %v2331
      %v2364 = vadd.f32 %v2296, %v2332
      %v2365 = vadd.f32 %v2297, %v2333
      %v2366 = vadd.f32 %v2298, %v2334
      %v2367 = vadd.f32 %v2299, %v2335
      %v2368 = vadd.f32 %v2300, %v2336
      %v2369 = vadd.f32 %v2301, %v2337
      %v2370 = vadd.f32 %v2302, %v2338
      %v2371 = vadd.f32 %v2303, %v2339
      %v2372 = vadd.f32 %v2304, %v2340
      %v2373 = vadd.f32 %v2305, %v2341
      %v2374 = vadd.f32 %v2306, %v2342
      %v2375 = vadd.f32 %v2307, %v2343
      %v2376 = vadd.f32 %v2308, %v2344
      %v2377 = vadd.f32 %v2309, %v2345
      %v2378 = vadd.f32 %v2310, %v2346
      %v2379 = vadd.f32 %v2311, %v2347
      %v2380 = vadd.f32 %v2312, %v2348
      %v2381 = vadd.f32 %v2313, %v2349
      %v2382 = vadd.f32 %v2314, %v2350
      %v2383 = vadd.f32 %v2315, %v2351
      %v2384 = vadd.f32 %v2316, %v2352
      %v2385 = vadd.f32 %v2317, %v2353
      %v2386 = vadd.f32 %v2318, %v2354
      %v2387 = vadd.f32 %v2319, %v2355
      %v2388 = vadd.f32 %v2320, %v2356
      %v2389 = vlaneseq
      %v2390 = vshrl.u32 %v2389, 7
      %v2391 = vsub.s32 0, %v2390
      %v2392 = vrot.slane %v507, %v2391
      %v2393 = vmul.f32 %v1856, %v2392
      %v2394 = vmul.f32 %v1772, %v2392
      %v2395 = vmul.f32 %v1857, %v2392
      %v2396 = vmul.f32 %v1775, %v2392
      %v2397 = vmul.f32 %v1858, %v2392
      %v2398 = vmul.f32 %v1778, %v2392
      %v2399 = vmul.f32 %v1859, %v2392
      %v2400 = vmul.f32 %v1781, %v2392
      %v2401 = vmul.f32 %v1860, %v2392
      %v2402 = vmul.f32 %v1784, %v2392
      %v2403 = vmul.f32 %v1861, %v2392
      %v2404 = vmul.f32 %v1787, %v2392
      %v2405 = vmul.f32 %v1862, %v2392
      %v2406 = vmul.f32 %v1790, %v2392
      %v2407 = vmul.f32 %v1863, %v2392
      %v2408 = vmul.f32 %v1793, %v2392
      %v2409 = vmul.f32 %v1864, %v2392
      %v2410 = vmul.f32 %v1796, %v2392
      %v2411 = vmul.f32 %v1865, %v2392
      %v2412 = vmul.f32 %v1799, %v2392
      %v2413 = vmul.f32 %v1866, %v2392
      %v2414 = vmul.f32 %v1802, %v2392
      %v2415 = vmul.f32 %v1867, %v2392
      %v2416 = vmul.f32 %v1805, %v2392
      %v2417 = vmul.f32 %v1868, %v2392
      %v2418 = vmul.f32 %v1808, %v2392
      %v2419 = vmul.f32 %v1869, %v2392
      %v2420 = vmul.f32 %v1811, %v2392
      %v2421 = vmul.f32 %v1870, %v2392
      %v2422 = vmul.f32 %v1814, %v2392
      %v2423 = vmul.f32 %v1871, %v2392
      %v2424 = vmul.f32 %v1817, %v2392
      %v2425 = vadd.f32 %v2357, %v2393
      %v2426 = vadd.f32 %v2358, %v2394
      %v2427 = vadd.f32 %v2359, %v2395
      %v2428 = vadd.f32 %v2360, %v2396
      %v2429 = vadd.f32 %v2361, %v2397
      %v2430 = vadd.f32 %v2362, %v2398
      %v2431 = vadd.f32 %v2363, %v2399
      %v2432 = vadd.f32 %v2364, %v2400
      %v2433 = vadd.f32 %v2365, %v2401
      %v2434 = vadd.f32 %v2366, %v2402
      %v2435 = vadd.f32 %v2367, %v2403
      %v2436 = vadd.f32 %v2368, %v2404
      %v2437 = vadd.f32 %v2369, %v2405
      %v2438 = vadd.f32 %v2370, %v2406
      %v2439 = vadd.f32 %v2371, %v2407
      %v2440 = vadd.f32 %v2372, %v2408
      %v2441 = vadd.f32 %v2373, %v2409
      %v2442 = vadd.f32 %v2374, %v2410
      %v2443 = vadd.f32 %v2375, %v2411
      %v2444 = vadd.f32 %v2376, %v2412
      %v2445 = vadd.f32 %v2377, %v2413
      %v2446 = vadd.f32 %v2378, %v2414
      %v2447 = vadd.f32 %v2379, %v2415
      %v2448 = vadd.f32 %v2380, %v2416
      %v2449 = vadd.f32 %v2381, %v2417
      %v2450 = vadd.f32 %v2382, %v2418
      %v2451 = vadd.f32 %v2383, %v2419
      %v2452 = vadd.f32 %v2384, %v2420
      %v2453 = vadd.f32 %v2385, %v2421
      %v2454 = vadd.f32 %v2386, %v2422
      %v2455 = vadd.f32 %v2387, %v2423
      %v2456 = vadd.f32 %v2388, %v2424
      %v2457 = vlaneseq
      %v2458 = vshrl.u32 %v2457, 7
      %v2459 = vsub.s32 1, %v2458
      %v2460 = vrot.slane %v507, %v2459
      %v2461 = vmul.f32 %v1695, %v2460
      %v2462 = vmul.f32 %v1696, %v2460
      %v2463 = vmul.f32 %v1697, %v2460
      %v2464 = vmul.f32 %v1698, %v2460
      %v2465 = vmul.f32 %v1699, %v2460
      %v2466 = vmul.f32 %v1700, %v2460
      %v2467 = vmul.f32 %v1701, %v2460
      %v2468 = vmul.f32 %v1702, %v2460
      %v2469 = vmul.f32 %v1703, %v2460
      %v2470 = vmul.f32 %v1704, %v2460
      %v2471 = vmul.f32 %v1705, %v2460
      %v2472 = vmul.f32 %v1706, %v2460
      %v2473 = vmul.f32 %v1707, %v2460
      %v2474 = vmul.f32 %v1708, %v2460
      %v2475 = vmul.f32 %v1709, %v2460
      %v2476 = vmul.f32 %v1710, %v2460
      %v2477 = vmul.f32 %v1711, %v2460
      %v2478 = vmul.f32 %v1712, %v2460
      %v2479 = vmul.f32 %v1713, %v2460
      %v2480 = vmul.f32 %v1714, %v2460
      %v2481 = vmul.f32 %v1715, %v2460
      %v2482 = vmul.f32 %v1716, %v2460
      %v2483 = vmul.f32 %v1717, %v2460
      %v2484 = vmul.f32 %v1718, %v2460
      %v2485 = vmul.f32 %v1719, %v2460
      %v2486 = vmul.f32 %v1720, %v2460
      %v2487 = vmul.f32 %v1721, %v2460
      %v2488 = vmul.f32 %v1722, %v2460
      %v2489 = vmul.f32 %v1723, %v2460
      %v2490 = vmul.f32 %v1724, %v2460
      %v2491 = vmul.f32 %v1725, %v2460
      %v2492 = vmul.f32 %v1726, %v2460
      %v2493 = vadd.f32 %v2425, %v2461
      %v2494 = vadd.f32 %v2426, %v2462
      %v2495 = vadd.f32 %v2427, %v2463
      %v2496 = vadd.f32 %v2428, %v2464
      %v2497 = vadd.f32 %v2429, %v2465
      %v2498 = vadd.f32 %v2430, %v2466
      %v2499 = vadd.f32 %v2431, %v2467
      %v2500 = vadd.f32 %v2432, %v2468
      %v2501 = vadd.f32 %v2433, %v2469
      %v2502 = vadd.f32 %v2434, %v2470
      %v2503 = vadd.f32 %v2435, %v2471
      %v2504 = vadd.f32 %v2436, %v2472
      %v2505 = vadd.f32 %v2437, %v2473
      %v2506 = vadd.f32 %v2438, %v2474
      %v2507 = vadd.f32 %v2439, %v2475
      %v2508 = vadd.f32 %v2440, %v2476
      %v2509 = vadd.f32 %v2441, %v2477
      %v2510 = vadd.f32 %v2442, %v2478
      %v2511 = vadd.f32 %v2443, %v2479
      %v2512 = vadd.f32 %v2444, %v2480
      %v2513 = vadd.f32 %v2445, %v2481
      %v2514 = vadd.f32 %v2446, %v2482
      %v2515 = vadd.f32 %v2447, %v2483
      %v2516 = vadd.f32 %v2448, %v2484
      %v2517 = vadd.f32 %v2449, %v2485
      %v2518 = vadd.f32 %v2450, %v2486
      %v2519 = vadd.f32 %v2451, %v2487
      %v2520 = vadd.f32 %v2452, %v2488
      %v2521 = vadd.f32 %v2453, %v2489
      %v2522 = vadd.f32 %v2454, %v2490
      %v2523 = vadd.f32 %v2455, %v2491
      %v2524 = vadd.f32 %v2456, %v2492
      %v2525 = vlaneseq
      %v2526 = vshrl.u32 %v2525, 7
      %v2527 = vsub.s32 2, %v2526
      %v2528 = vrot.slane %v507, %v2527
      %v2529 = vmul.f32 %v1881, %v2528
      %v2530 = vmul.f32 %v1965, %v2528
      %v2531 = vmul.f32 %v1884, %v2528
      %v2532 = vmul.f32 %v1966, %v2528
      %v2533 = vmul.f32 %v1887, %v2528
      %v2534 = vmul.f32 %v1967, %v2528
      %v2535 = vmul.f32 %v1890, %v2528
      %v2536 = vmul.f32 %v1968, %v2528
      %v2537 = vmul.f32 %v1893, %v2528
      %v2538 = vmul.f32 %v1969, %v2528
      %v2539 = vmul.f32 %v1896, %v2528
      %v2540 = vmul.f32 %v1970, %v2528
      %v2541 = vmul.f32 %v1899, %v2528
      %v2542 = vmul.f32 %v1971, %v2528
      %v2543 = vmul.f32 %v1902, %v2528
      %v2544 = vmul.f32 %v1972, %v2528
      %v2545 = vmul.f32 %v1905, %v2528
      %v2546 = vmul.f32 %v1973, %v2528
      %v2547 = vmul.f32 %v1908, %v2528
      %v2548 = vmul.f32 %v1974, %v2528
      %v2549 = vmul.f32 %v1911, %v2528
      %v2550 = vmul.f32 %v1975, %v2528
      %v2551 = vmul.f32 %v1914, %v2528
      %v2552 = vmul.f32 %v1976, %v2528
      %v2553 = vmul.f32 %v1917, %v2528
      %v2554 = vmul.f32 %v1977, %v2528
      %v2555 = vmul.f32 %v1920, %v2528
      %v2556 = vmul.f32 %v1978, %v2528
      %v2557 = vmul.f32 %v1923, %v2528
      %v2558 = vmul.f32 %v1979, %v2528
      %v2559 = vmul.f32 %v1926, %v2528
      %v2560 = vmul.f32 %v1980, %v2528
      %v2561 = vadd.f32 %v2493, %v2529
      %v2562 = vadd.f32 %v2494, %v2530
      %v2563 = vadd.f32 %v2495, %v2531
      %v2564 = vadd.f32 %v2496, %v2532
      %v2565 = vadd.f32 %v2497, %v2533
      %v2566 = vadd.f32 %v2498, %v2534
      %v2567 = vadd.f32 %v2499, %v2535
      %v2568 = vadd.f32 %v2500, %v2536
      %v2569 = vadd.f32 %v2501, %v2537
      %v2570 = vadd.f32 %v2502, %v2538
      %v2571 = vadd.f32 %v2503, %v2539
      %v2572 = vadd.f32 %v2504, %v2540
      %v2573 = vadd.f32 %v2505, %v2541
      %v2574 = vadd.f32 %v2506, %v2542
      %v2575 = vadd.f32 %v2507, %v2543
      %v2576 = vadd.f32 %v2508, %v2544
      %v2577 = vadd.f32 %v2509, %v2545
      %v2578 = vadd.f32 %v2510, %v2546
      %v2579 = vadd.f32 %v2511, %v2547
      %v2580 = vadd.f32 %v2512, %v2548
      %v2581 = vadd.f32 %v2513, %v2549
      %v2582 = vadd.f32 %v2514, %v2550
      %v2583 = vadd.f32 %v2515, %v2551
      %v2584 = vadd.f32 %v2516, %v2552
      %v2585 = vadd.f32 %v2517, %v2553
      %v2586 = vadd.f32 %v2518, %v2554
      %v2587 = vadd.f32 %v2519, %v2555
      %v2588 = vadd.f32 %v2520, %v2556
      %v2589 = vadd.f32 %v2521, %v2557
      %v2590 = vadd.f32 %v2522, %v2558
      %v2591 = vadd.f32 %v2523, %v2559
      %v2592 = vadd.f32 %v2524, %v2560
      %v2594 = vlaneseq
      %v2595 = vshrl.u32 %v2594, 7
      %v2596 = vsub.s32 0, %v2595
      %v2597 = vrot.slane %v508, %v2596
      %v2599 = vmul.f32 %v2561, %v2597
      %v2600 = vmul.f32 %v2562, %v2597
      %v2601 = vmul.f32 %v2563, %v2597
      %v2602 = vmul.f32 %v2564, %v2597
      %v2603 = vmul.f32 %v2565, %v2597
      %v2604 = vmul.f32 %v2566, %v2597
      %v2605 = vmul.f32 %v2567, %v2597
      %v2606 = vmul.f32 %v2568, %v2597
      %v2607 = vmul.f32 %v2569, %v2597
      %v2608 = vmul.f32 %v2570, %v2597
      %v2609 = vmul.f32 %v2571, %v2597
      %v2610 = vmul.f32 %v2572, %v2597
      %v2611 = vmul.f32 %v2573, %v2597
      %v2612 = vmul.f32 %v2574, %v2597
      %v2613 = vmul.f32 %v2575, %v2597
      %v2614 = vmul.f32 %v2576, %v2597
      %v2615 = vmul.f32 %v2577, %v2597
      %v2616 = vmul.f32 %v2578, %v2597
      %v2617 = vmul.f32 %v2579, %v2597
      %v2618 = vmul.f32 %v2580, %v2597
      %v2619 = vmul.f32 %v2581, %v2597
      %v2620 = vmul.f32 %v2582, %v2597
      %v2621 = vmul.f32 %v2583, %v2597
      %v2622 = vmul.f32 %v2584, %v2597
      %v2623 = vmul.f32 %v2585, %v2597
      %v2624 = vmul.f32 %v2586, %v2597
      %v2625 = vmul.f32 %v2587, %v2597
      %v2626 = vmul.f32 %v2588, %v2597
      %v2627 = vmul.f32 %v2589, %v2597
      %v2628 = vmul.f32 %v2590, %v2597
      %v2629 = vmul.f32 %v2591, %v2597
      %v2630 = vmul.f32 %v2592, %v2597
      %v2632 = vlaneseq
      %v2633 = vshrl.u32 %v2632, 7
      %v2634 = vsub.s32 0, %v2633
      %v2635 = vrot.slane %v509, %v2634
      %v2637 = vadd.f32 %v2599, %v2635
      %v2638 = vadd.f32 %v2600, %v2635
      %v2639 = vadd.f32 %v2601, %v2635
      %v2640 = vadd.f32 %v2602, %v2635
      %v2641 = vadd.f32 %v2603, %v2635
      %v2642 = vadd.f32 %v2604, %v2635
      %v2643 = vadd.f32 %v2605, %v2635
      %v2644 = vadd.f32 %v2606, %v2635
      %v2645 = vadd.f32 %v2607, %v2635
      %v2646 = vadd.f32 %v2608, %v2635
      %v2647 = vadd.f32 %v2609, %v2635
      %v2648 = vadd.f32 %v2610, %v2635
      %v2649 = vadd.f32 %v2611, %v2635
      %v2650 = vadd.f32 %v2612, %v2635
      %v2651 = vadd.f32 %v2613, %v2635
      %v2652 = vadd.f32 %v2614, %v2635
      %v2653 = vadd.f32 %v2615, %v2635
      %v2654 = vadd.f32 %v2616, %v2635
      %v2655 = vadd.f32 %v2617, %v2635
      %v2656 = vadd.f32 %v2618, %v2635
      %v2657 = vadd.f32 %v2619, %v2635
      %v2658 = vadd.f32 %v2620, %v2635
      %v2659 = vadd.f32 %v2621, %v2635
      %v2660 = vadd.f32 %v2622, %v2635
      %v2661 = vadd.f32 %v2623, %v2635
      %v2662 = vadd.f32 %v2624, %v2635
      %v2663 = vadd.f32 %v2625, %v2635
      %v2664 = vadd.f32 %v2626, %v2635
      %v2665 = vadd.f32 %v2627, %v2635
      %v2666 = vadd.f32 %v2628, %v2635
      %v2667 = vadd.f32 %v2629, %v2635
      %v2668 = vadd.f32 %v2630, %v2635
      %v2669 = vmax.f32 %v2637, 0.0
      %v2670 = vmax.f32 %v2638, 0.0
      %v2671 = vmax.f32 %v2639, 0.0
      %v2672 = vmax.f32 %v2640, 0.0
      %v2673 = vmax.f32 %v2641, 0.0
      %v2674 = vmax.f32 %v2642, 0.0
      %v2675 = vmax.f32 %v2643, 0.0
      %v2676 = vmax.f32 %v2644, 0.0
      %v2677 = vmax.f32 %v2645, 0.0
      %v2678 = vmax.f32 %v2646, 0.0
      %v2679 = vmax.f32 %v2647, 0.0
      %v2680 = vmax.f32 %v2648, 0.0
      %v2681 = vmax.f32 %v2649, 0.0
      %v2682 = vmax.f32 %v2650, 0.0
      %v2683 = vmax.f32 %v2651, 0.0
      %v2684 = vmax.f32 %v2652, 0.0
      %v2685 = vmax.f32 %v2653, 0.0
      %v2686 = vmax.f32 %v2654, 0.0
      %v2687 = vmax.f32 %v2655, 0.0
      %v2688 = vmax.f32 %v2656, 0.0
      %v2689 = vmax.f32 %v2657, 0.0
      %v2690 = vmax.f32 %v2658, 0.0
      %v2691 = vmax.f32 %v2659, 0.0
      %v2692 = vmax.f32 %v2660, 0.0
      %v2693 = vmax.f32 %v2661, 0.0
      %v2694 = vmax.f32 %v2662, 0.0
      %v2695 = vmax.f32 %v2663, 0.0
      %v2696 = vmax.f32 %v2664, 0.0
      %v2697 = vmax.f32 %v2665, 0.0
      %v2698 = vmax.f32 %v2666, 0.0
      %v2699 = vmax.f32 %v2667, 0.0
      %v2700 = vmax.f32 %v2668, 0.0
      %2733 = vrot.lane.b32.xlu0 %v2669, 4
      %v2734 = vpop.permute.xlu0 %2733
      %2735 = vrot.lane.b32.xlu0 %v2670, 4
      %v2736 = vpop.permute.xlu0 %2735
      %2737 = vrot.lane.b32.xlu0 %v2671, 4
      %v2738 = vpop.permute.xlu0 %2737
      %2739 = vrot.lane.b32.xlu0 %v2672, 4
      %v2740 = vpop.permute.xlu0 %2739
      %2741 = vrot.lane.b32.xlu0 %v2673, 4
      %v2742 = vpop.permute.xlu0 %2741
      %2743 = vrot.lane.b32.xlu0 %v2674, 4
      %v2744 = vpop.permute.xlu0 %2743
      %2745 = vrot.lane.b32.xlu0 %v2675, 4
      %v2746 = vpop.permute.xlu0 %2745
      %2747 = vrot.lane.b32.xlu0 %v2676, 4
      %v2748 = vpop.permute.xlu0 %2747
      %2749 = vrot.lane.b32.xlu0 %v2677, 4
      %v2750 = vpop.permute.xlu0 %2749
      %2751 = vrot.lane.b32.xlu0 %v2678, 4
      %v2752 = vpop.permute.xlu0 %2751
      %2753 = vrot.lane.b32.xlu0 %v2679, 4
      %v2754 = vpop.permute.xlu0 %2753
      %2755 = vrot.lane.b32.xlu0 %v2680, 4
      %v2756 = vpop.permute.xlu0 %2755
      %2757 = vrot.lane.b32.xlu0 %v2681, 4
      %v2758 = vpop.permute.xlu0 %2757
      %2759 = vrot.lane.b32.xlu0 %v2682, 4
      %v2760 = vpop.permute.xlu0 %2759
      %2761 = vrot.lane.b32.xlu0 %v2683, 4
      %v2762 = vpop.permute.xlu0 %2761
      %2763 = vrot.lane.b32.xlu0 %v2684, 4
      %v2764 = vpop.permute.xlu0 %2763
      %2765 = vrot.lane.b32.xlu0 %v2685, 4
      %v2766 = vpop.permute.xlu0 %2765
      %2767 = vrot.lane.b32.xlu0 %v2686, 4
      %v2768 = vpop.permute.xlu0 %2767
      %2769 = vrot.lane.b32.xlu0 %v2687, 4
      %v2770 = vpop.permute.xlu0 %2769
      %2771 = vrot.lane.b32.xlu0 %v2688, 4
      %v2772 = vpop.permute.xlu0 %2771
      %2773 = vrot.lane.b32.xlu0 %v2689, 4
      %v2774 = vpop.permute.xlu0 %2773
      %2775 = vrot.lane.b32.xlu0 %v2690, 4
      %v2776 = vpop.permute.xlu0 %2775
      %2777 = vrot.lane.b32.xlu0 %v2691, 4
      %v2778 = vpop.permute.xlu0 %2777
      %2779 = vrot.lane.b32.xlu0 %v2692, 4
      %v2780 = vpop.permute.xlu0 %2779
      %2781 = vrot.lane.b32.xlu0 %v2693, 4
      %v2782 = vpop.permute.xlu0 %2781
      %2783 = vrot.lane.b32.xlu0 %v2694, 4
      %v2784 = vpop.permute.xlu0 %2783
      %2785 = vrot.lane.b32.xlu0 %v2695, 4
      %v2786 = vpop.permute.xlu0 %2785
      %2787 = vrot.lane.b32.xlu0 %v2696, 4
      %v2788 = vpop.permute.xlu0 %2787
      %2789 = vrot.lane.b32.xlu0 %v2697, 4
      %v2790 = vpop.permute.xlu0 %2789
      %2791 = vrot.lane.b32.xlu0 %v2698, 4
      %v2792 = vpop.permute.xlu0 %2791
      %2793 = vrot.lane.b32.xlu0 %v2699, 4
      %v2794 = vpop.permute.xlu0 %2793
      %2795 = vrot.lane.b32.xlu0 %v2700, 4
      %v2796 = vpop.permute.xlu0 %2795
      %vm2829 = vcmask 31744
      %v2830 = vsel %vm2829, %v1693, %v2734
      %v2831 = vsel %vm2829, %v1694, %v2736
      %v2832 = vsel %vm2829, %v1695, %v2738
      %v2833 = vsel %vm2829, %v1696, %v2740
      %v2834 = vsel %vm2829, %v1697, %v2742
      %v2835 = vsel %vm2829, %v1698, %v2744
      %v2836 = vsel %vm2829, %v1699, %v2746
      %v2837 = vsel %vm2829, %v1700, %v2748
      %v2838 = vsel %vm2829, %v1701, %v2750
      %v2839 = vsel %vm2829, %v1702, %v2752
      %v2840 = vsel %vm2829, %v1703, %v2754
      %v2841 = vsel %vm2829, %v1704, %v2756
      %v2842 = vsel %vm2829, %v1705, %v2758
      %v2843 = vsel %vm2829, %v1706, %v2760
      %v2844 = vsel %vm2829, %v1707, %v2762
      %v2845 = vsel %vm2829, %v1708, %v2764
      %v2846 = vsel %vm2829, %v1709, %v2766
      %v2847 = vsel %vm2829, %v1710, %v2768
      %v2848 = vsel %vm2829, %v1711, %v2770
      %v2849 = vsel %vm2829, %v1712, %v2772
      %v2850 = vsel %vm2829, %v1713, %v2774
      %v2851 = vsel %vm2829, %v1714, %v2776
      %v2852 = vsel %vm2829, %v1715, %v2778
      %v2853 = vsel %vm2829, %v1716, %v2780
      %v2854 = vsel %vm2829, %v1717, %v2782
      %v2855 = vsel %vm2829, %v1718, %v2784
      %v2856 = vsel %vm2829, %v1719, %v2786
      %v2857 = vsel %vm2829, %v1720, %v2788
      %v2858 = vsel %vm2829, %v1721, %v2790
      %v2859 = vsel %vm2829, %v1722, %v2792
      %v2860 = vsel %vm2829, %v1723, %v2794
      %v2861 = vsel %vm2829, %v1724, %v2796
      %vm2862 = vcmask 64512
      %2863 = vst.msk [vmem:[%s499] sm:$0xff] %vm2862, %v2830
      %2864 = vst.msk [vmem:[%s499 + $0x8] sm:$0xff] %vm2862, %v2831
      %2865 = vst.msk [vmem:[%s499 + $0x10] sm:$0xff] %vm2862, %v2832
      %2866 = vst.msk [vmem:[%s499 + $0x18] sm:$0xff] %vm2862, %v2833
      %2867 = vst.msk [vmem:[%s499 + $0x20] sm:$0xff] %vm2862, %v2834
      %2868 = vst.msk [vmem:[%s499 + $0x28] sm:$0xff] %vm2862, %v2835
      %2869 = vst.msk [vmem:[%s499 + $0x30] sm:$0xff] %vm2862, %v2836
      %2870 = vst.msk [vmem:[%s499 + $0x38] sm:$0xff] %vm2862, %v2837
      %2871 = vst.msk [vmem:[%s499 + $0x40] sm:$0xff] %vm2862, %v2838
      %2872 = vst.msk [vmem:[%s499 + $0x48] sm:$0xff] %vm2862, %v2839
      %2873 = vst.msk [vmem:[%s499 + $0x50] sm:$0xff] %vm2862, %v2840
      %2874 = vst.msk [vmem:[%s499 + $0x58] sm:$0xff] %vm2862, %v2841
      %2875 = vst.msk [vmem:[%s499 + $0x60] sm:$0xff] %vm2862, %v2842
      %2876 = vst.msk [vmem:[%s499 + $0x68] sm:$0xff] %vm2862, %v2843
      %2877 = vst.msk [vmem:[%s499 + $0x70] sm:$0xff] %vm2862, %v2844
      %2878 = vst.msk [vmem:[%s499 + $0x78] sm:$0xff] %vm2862, %v2845
      %2879 = vst.msk [vmem:[%s499 + $0x80] sm:$0xff] %vm2862, %v2846
      %2880 = vst.msk [vmem:[%s499 + $0x88] sm:$0xff] %vm2862, %v2847
      %2881 = vst.msk [vmem:[%s499 + $0x90] sm:$0xff] %vm2862, %v2848
      %2882 = vst.msk [vmem:[%s499 + $0x98] sm:$0xff] %vm2862, %v2849
      %2883 = vst.msk [vmem:[%s499 + $0xa0] sm:$0xff] %vm2862, %v2850
      %2884 = vst.msk [vmem:[%s499 + $0xa8] sm:$0xff] %vm2862, %v2851
      %2885 = vst.msk [vmem:[%s499 + $0xb0] sm:$0xff] %vm2862, %v2852
      %2886 = vst.msk [vmem:[%s499 + $0xb8] sm:$0xff] %vm2862, %v2853
      %2887 = vst.msk [vmem:[%s499 + $0xc0] sm:$0xff] %vm2862, %v2854
      %2888 = vst.msk [vmem:[%s499 + $0xc8] sm:$0xff] %vm2862, %v2855
      %2889 = vst.msk [vmem:[%s499 + $0xd0] sm:$0xff] %vm2862, %v2856
      %2890 = vst.msk [vmem:[%s499 + $0xd8] sm:$0xff] %vm2862, %v2857
      %2891 = vst.msk [vmem:[%s499 + $0xe0] sm:$0xff] %vm2862, %v2858
      %2892 = vst.msk [vmem:[%s499 + $0xe8] sm:$0xff] %vm2862, %v2859
      %2893 = vst.msk [vmem:[%s499 + $0xf0] sm:$0xff] %vm2862, %v2860
      %2894 = vst.msk [vmem:[%s499 + $0xf8] sm:$0xff] %vm2862, %v2861
      %s2895 = smul.u32 16, %s25
      %p2896 = scmp.lt.s32.totalorder %s24, 1
      %s2897 = scalar_select %p2896, %s24, 1
      %p2898 = scmp.lt.s32.totalorder %s2895, 15
      %s2899 = scalar_select %p2898, %s2895, 15
      %s2900 = smul.addr %s2899, 2
      %s2901 = smul.addr %s2897, 32
      %s2902 = sadd.s32 %s2900, %s2901
      %s2903 = smul.addr %s2902, 8
      %s2904 = scalar_lea.vmem %s9, %s2903
      // Predicated region
      $region57: #{tpu_custom_call.1} parent=55 // pred_check
        %p2905 = pneg %p278
      $region58: #{tpu_custom_call.1} parent=55 // pred_check_branch
        %2907 = sbr.rel (%p2905) target = $region60
      $region59: #{tpu_custom_call.1} parent=55 // pred_region
        %s2908 = smul.u32 16, %s25
      $region60: #{tpu_custom_call.1} parent=55 // pred_fallthru
        _
    $region56: #{tpu_custom_call.1} parent=5 // pred_fallthru
      _
    %p2909 = scmp.le.s32.totalorder 2, %s15
    // Predicated region
    $region61: #{tpu_custom_call.1} parent=5 // pred_check
      %p2910 = pneg %p2909
    $region62: #{tpu_custom_call.1} parent=5 // pred_check_branch
      %2912 = sbr.rel (%p2910) target = $region64
    $region63: #{tpu_custom_call.1} parent=5 // pred_region
      %s2913 = ssub.s32 %s15, 2
      // Predicated region
      $region65: #{tpu_custom_call.1} parent=63 // pred_check
        %p2914 = pneg %p284
      $region66: #{tpu_custom_call.1} parent=63 // pred_check_branch
        %2916 = sbr.rel (%p2914) target = $region68
      $region67: #{tpu_custom_call.1} parent=63 // pred_region
        %s2917 = smul.u32 16, %s27
        %p2918 = scmp.lt.s32.totalorder %s26, 1
        %s2919 = scalar_select %p2918, %s26, 1
        %p2920 = scmp.lt.s32.totalorder %s2917, 15
        %s2921 = scalar_select %p2920, %s2917, 15
        %s2922 = smul.addr %s2921, 2
        %s2923 = smul.addr %s2919, 32
        %s2924 = sadd.s32 %s2922, %s2923
        %s2925 = smul.addr %s2924, 8
        %s2926 = scalar_lea.vmem %s9, %s2925
      $region68: #{tpu_custom_call.1} parent=63 // pred_fallthru
        _
    $region64: #{tpu_custom_call.1} parent=5 // pred_fallthru
      _
  $region6: #{tpu_custom_call.1} parent=0 // loop_footer
    %s19 = sadd.s32 1, %s15
  $region7: #{tpu_custom_call.1} parent=0 // loop_footer_branch
    %14 = sbr.rel target = $region3
  $region8: #{tpu_custom_call.1} parent=0 // loop_exit
    _

</llo_original>
